<compile_context>
chip_gen: v7x
topology: tpu7x:2x2x1
jax: 0.10.0
libtpu: 0.0.40
codegen_flags: <defaults>
</compile_context>

<pallas_src>
import functools

import jax
import jax.numpy as jnp
import numpy as np
from jax import lax
from jax.experimental import pallas as pl
from jax.experimental.pallas import tpu as pltpu

LEAK = 0.01   # nn.LeakyReLU default negative_slope
HP = 128      # per-gate lane padding for the GRU hidden state


def _align(n, m):
    return ((n + m - 1) // m) * m


def cnn_gru_critic_kernel(act_ref, wt_ref, out_ref, *, dims, offs):
    B, T, feat = dims['B'], dims['T'], dims['feat']
    K1, N1, nX1 = dims['K1'], dims['N1'], dims['nX1']
    wrow, arow = dims['w_row'], dims['a_row']
    GW = 3 * HP
    f32, bf16 = jnp.float32, jnp.bfloat16

    dot = functools.partial(jnp.dot, preferred_element_type=f32)
    lrelu = lambda v: jnp.where(v > 0, v, LEAK * v)
    wt = lambda name, r, c: wt_ref[offs[name]:offs[name] + r, 0:c]  # static slices

    # ---- conv1: ONE width-unrolled matmul over every (row, batch) position --
    x1 = act_ref[0:nX1, 0:K1].astype(bf16)                      # [Ho1*B, 3*W*Cin]
    h1 = lrelu(dot(x1, wt('w1', K1, N1)) + wt('b1', 1, N1).astype(f32))
    h1 = h1.astype(bf16)                                        # [Ho1*B, Wo1*C2]

    # ---- conv2 (C_out=1): three shifted-row matmuls, lane-dense, VPU sum ----
    o2 = offs['w2']
    g = dot(h1[0:T * B, :], wt_ref[o2:o2 + N1, 0:feat])
    g = g + dot(h1[B:B + T * B, :], wt_ref[o2 + N1:o2 + 2 * N1, 0:feat])
    g = g + dot(h1[2 * B:2 * B + T * B, :], wt_ref[o2 + 2 * N1:o2 + 3 * N1, 0:feat])
    g = lrelu(g + wt('b2', 1, feat).astype(f32))                # [T*B, feat], row t*B+b

    # ---- GRU: input-to-hidden projections hoisted into ONE matmul ----------
    # Time-major rows (t*B+b); the result stays live in vregs (no scratch).
    gxv = dot(g.astype(bf16), wt('gih', feat, GW)) + wt('bih', 1, GW).astype(f32)

    ghh = wt('ghh', HP, GW)                                     # [128, 384] bf16
    bhh = wt('bhh', 1, GW).astype(f32)
    h = jnp.zeros((B, HP), f32)
    for t in range(T):             # static unroll: one MXU op per step,
        gx = gxv[t * B:(t + 1) * B, :]      # gates at whole-vreg lane offsets
        gh = dot(h.astype(bf16), ghh) + bhh
        r = jax.nn.sigmoid(gx[:, 0:HP] + gh[:, 0:HP])
        z = jax.nn.sigmoid(gx[:, HP:2 * HP] + gh[:, HP:2 * HP])
        n = jnp.tanh(gx[:, 2 * HP:3 * HP] + r * gh[:, 2 * HP:3 * HP])
        h = (1.0 - z) * n + z * h
    hs = lrelu(h).astype(bf16)     # padded lanes stay exactly zero

    # ---- fc heads: split matmuls (no lane concat), 128-lane padded ----------
    wv = act_ref[wrow:wrow + B, 0:HP].astype(bf16)
    av = act_ref[arow:arow + B, 0:HP].astype(bf16)
    y1 = lrelu(dot(hs, wt('f1wh', HP, HP)) + dot(wv, wt('f1ww', HP, HP))
               + wt('f1b', 1, HP).astype(f32))
    y2 = lrelu(dot(y1.astype(bf16), wt('f2wy', HP, HP))
               + dot(av, wt('f2wa', HP, HP))
               + wt('f2b', 1, HP).astype(f32))
    out_ref[...] = y2              # [B, 128] lane-dense store; column 0 = value


def pack_params(lp):
    """Pack logical (PyTorch-layout-equivalent) params into ONE bf16 slab."""
    c1w = np.asarray(lp['conv1_w'], np.float32)       # [3,3,Cin,C2] (HWIO)
    c2w = np.asarray(lp['conv2_w'], np.float32)       # [3,3,C2,1]
    Cin, C2 = c1w.shape[2], c1w.shape[3]
    feat, Hd = lp['gih'].shape[1], lp['gih'].shape[2]
    W = feat + 4                                       # num_stocks
    Wo1 = W - 2
    K1, N1 = 3 * W * Cin, Wo1 * C2

    # conv1 as a width-unrolled matmul: [3*W*Cin, Wo1*C2] (zeros elsewhere).
    W1 = np.zeros((K1, N1), np.float32)
    for di in range(3):
        for dj in range(3):
            for f in range(Wo1):
                r = di * W * Cin + (f + dj) * Cin
                W1[r:r + Cin, f * C2:(f + 1) * C2] = c1w[di, dj]
    b1 = np.tile(np.asarray(lp['conv1_b'], np.float32), Wo1)[None, :]

    # conv2 row-taps as three stacked [Wo1*C2, feat] matmuls.
    W2 = np.zeros((3, N1, feat), np.float32)
    for di in range(3):
        for dj in range(3):
            for f in range(feat):
                W2[di, (f + dj) * C2:(f + dj + 1) * C2, f] = c2w[di, dj, :, 0]
    W2 = W2.reshape(3 * N1, feat)
    b2 = np.full((1, feat), float(np.asarray(lp['conv2_b'])[0]), np.float32)

    # GRU: per-gate blocks at 128-lane offsets (padded lanes provably inert).
    gih = np.zeros((feat, 3 * HP), np.float32)
    ghh = np.zeros((HP, 3 * HP), np.float32)
    bih = np.zeros((1, 3 * HP), np.float32)
    bhh = np.zeros((1, 3 * HP), np.float32)
    for gi in range(3):
        lo = gi * HP
        gih[:, lo:lo + Hd] = np.asarray(lp['gih'][gi])
        ghh[:Hd, lo:lo + Hd] = np.asarray(lp['ghh'][gi])
        bih[0, lo:lo + Hd] = np.asarray(lp['bih'][gi])
        bhh[0, lo:lo + Hd] = np.asarray(lp['bhh'][gi])

    # fc heads, lane-padded to 128 so y1 / y2 are whole-vreg.
    f1w = np.asarray(lp['f1w'], np.float32)            # [2*Hd, Hd]
    f2w = np.asarray(lp['f2w'], np.float32)            # [2*Hd, 1]
    f1wh = np.zeros((HP, HP), np.float32); f1wh[:Hd, :Hd] = f1w[:Hd]
    f1ww = np.zeros((HP, HP), np.float32); f1ww[:Hd, :Hd] = f1w[Hd:]
    f1b = np.zeros((1, HP), np.float32);  f1b[0, :Hd] = np.asarray(lp['f1b'])
    f2wy = np.zeros((HP, HP), np.float32); f2wy[:Hd, 0] = f2w[:Hd, 0]
    f2wa = np.zeros((HP, HP), np.float32); f2wa[:Hd, 0] = f2w[Hd:, 0]
    f2b = np.zeros((1, HP), np.float32);  f2b[0, 0] = float(np.asarray(lp['f2b'])[0])

    blocks = dict(w1=W1, b1=b1, w2=W2, b2=b2, gih=gih, bih=bih, ghh=ghh,
                  bhh=bhh, f1wh=f1wh, f1ww=f1ww, f1b=f1b,
                  f2wy=f2wy, f2wa=f2wa, f2b=f2b)
    offs, rows = {}, 0
    for name, blk in blocks.items():
        rows = _align(rows, 16)                        # bf16 sublane packing
        offs[name] = rows
        rows += blk.shape[0]
    slab = np.zeros((_align(rows, 16), 3 * HP), np.float32)
    for name, blk in blocks.items():
        slab[offs[name]:offs[name] + blk.shape[0], :blk.shape[1]] = blk

    return dict(slab=jnp.asarray(slab, jnp.bfloat16), offs=offs,
                Cin=Cin, C2=C2, Hd=Hd, feat=feat)


def cnn_gru_critic(x_nchw, w, action, packed):
    """x_nchw: [B, C_in, H, num_stocks]; w, action: [B, num_stocks+1] -> [B, 1]."""
    slab, offs = packed['slab'], packed['offs']
    Cin, Hd, feat = packed['Cin'], packed['Hd'], packed['feat']
    C2 = packed['C2']
    B, _, H, W = x_nchw.shape
    Ho1, Wo1, T = H - 2, W - 2, H - 4
    K1, N1 = 3 * W * Cin, Wo1 * C2
    nX1 = Ho1 * B

    # ---- wrapper-side layout plumbing (free in XLA) -------------------------
    x = jnp.transpose(x_nchw, (0, 2, 3, 1)).astype(jnp.float32)   # NHWC
    xr = x.reshape(B, H, W * Cin)
    # conv1 im2col along H only: row (i, b) = image rows i..i+2 of batch b.
    X1 = jnp.stack([xr[:, i:i + 3, :].reshape(B, K1) for i in range(Ho1)], axis=0)
    X1 = X1.reshape(nX1, K1)

    # single activation slab: X1 + lane-padded w + action  -> one input DMA
    w_row = _align(nX1, 8)
    a_row = _align(w_row + B, 8)
    rows = _align(a_row + B, 8)
    lanes = _align(max(K1, HP), 128)
    act = jnp.zeros((rows, lanes), jnp.float32)
    act = act.at[0:nX1, 0:K1].set(X1)
    act = act.at[w_row:w_row + B, 0:Hd].set(w.astype(jnp.float32))
    act = act.at[a_row:a_row + B, 0:Hd].set(action.astype(jnp.float32))

    dims = dict(B=B, T=T, feat=feat, K1=K1, N1=N1, nX1=nX1,
                w_row=w_row, a_row=a_row)
    kernel = functools.partial(cnn_gru_critic_kernel, dims=dims, offs=offs)
    vmem = pl.BlockSpec(memory_space=pltpu.MemorySpace.VMEM)
    # TODO(synk): at realistic batch sizes add a ("parallel",) grid over B with
    # B-tiled BlockSpecs so v7x's two TensorCores each take half the batch and
    # VMEM residency stays bounded; at B=2 a grid only adds overhead.
    out = pl.pallas_call(
        kernel,
        out_shape=jax.ShapeDtypeStruct((B, HP), jnp.float32),
        in_specs=[vmem, vmem],
        out_specs=vmem,
    )(act, slab)
    return out[:, :1]


def init_logical_params(key, in_channels, num_stocks):
    """Deterministic synthetic params (kaiming-style std, a=0.01)."""
    C, C2 = in_channels, 2 * in_channels
    I, Hd = num_stocks - 4, num_stocks + 1
    a = 0.01

    def kaiming(k, shape, fan_in):
        std = (2.0 / ((1.0 + a * a) * fan_in)) ** 0.5
        return std * jax.random.normal(k, shape, jnp.float32)

    ks = jax.random.split(key, 10)
    return dict(
        conv1_w=kaiming(ks[0], (3, 3, C, C2), fan_in=9 * C),      # HWIO
        conv1_b=0.05 * jax.random.normal(ks[1], (C2,), jnp.float32),
        conv2_w=kaiming(ks[2], (3, 3, C2, 1), fan_in=9 * C2),
        conv2_b=0.05 * jax.random.normal(ks[3], (1,), jnp.float32),
        gih=kaiming(ks[4], (3, I, Hd), fan_in=I),                 # W_ih^T per gate
        ghh=kaiming(ks[5], (3, Hd, Hd), fan_in=Hd),               # W_hh^T per gate
        bih=jnp.zeros((3, Hd), jnp.float32),                      # zero-init biases
        bhh=jnp.zeros((3, Hd), jnp.float32),
        f1w=kaiming(ks[6], (2 * Hd, Hd), fan_in=2 * Hd),          # fc1 weight^T
        f1b=0.05 * jax.random.normal(ks[7], (Hd,), jnp.float32),
        f2w=kaiming(ks[8], (2 * Hd, 1), fan_in=2 * Hd),           # fc2 weight^T
        f2b=0.05 * jax.random.normal(ks[9], (1,), jnp.float32),
    )


def reference(x_nchw, w, action, lp):
    """Pure-JAX f32 reference of the same forward pass for validation."""
    x = jnp.transpose(x_nchw, (0, 2, 3, 1)).astype(jnp.float32)
    lr = lambda v: jnp.where(v > 0, v, LEAK * v)
    h1 = lax.conv_general_dilated(x, lp['conv1_w'], (1, 1), 'VALID',
                                  dimension_numbers=('NHWC', 'HWIO', 'NHWC'))
    h1 = lr(h1 + lp['conv1_b'])
    h2 = lax.conv_general_dilated(h1, lp['conv2_w'], (1, 1), 'VALID',
                                  dimension_numbers=('NHWC', 'HWIO', 'NHWC'))
    g = lr(h2[..., 0] + lp['conv2_b'][0])                   # [B, seq, feat]
    B, T, _ = g.shape
    Hd = lp['ghh'].shape[1]
    h = jnp.zeros((B, Hd), jnp.float32)
    for t in range(T):
        xt = g[:, t, :]
        r = jax.nn.sigmoid(xt @ lp['gih'][0] + lp['bih'][0]
                           + h @ lp['ghh'][0] + lp['bhh'][0])
        z = jax.nn.sigmoid(xt @ lp['gih'][1] + lp['bih'][1]
                           + h @ lp['ghh'][1] + lp['bhh'][1])
        n = jnp.tanh(xt @ lp['gih'][2] + lp['bih'][2]
                     + r * (h @ lp['ghh'][2] + lp['bhh'][2]))
        h = (1.0 - z) * n + z * h
    h = lr(h)
    y1 = lr(jnp.concatenate([h, w], axis=-1) @ lp['f1w'] + lp['f1b'])
    y2 = lr(jnp.concatenate([y1, action], axis=-1) @ lp['f2w'] + lp['f2b'])
    return y2


if __name__ == "__main__":
    in_channels, num_stocks = 4, 16
    B, H = 2, 12                    # seq_len = H - 4 = 8
    W = num_stocks                  # gru_input = num_stocks - 4

    key = jax.random.PRNGKey(0)
    kx, kw, ka, kp = jax.random.split(key, 4)
    x = jax.random.normal(kx, (B, in_channels, H, W), jnp.float32)
    w = jax.random.normal(kw, (B, num_stocks + 1), jnp.float32)
    action = jax.random.normal(ka, (B, num_stocks + 1), jnp.float32)

    lp = init_logical_params(kp, in_channels, num_stocks)
    packed = pack_params(lp)

    out = jax.block_until_ready(cnn_gru_critic(x, w, action, packed))
    ref = reference(x, w, action, lp)

    assert out.shape == (B, 1)
    # bf16 MXU operands (f32 accumulation) per the perf review -> loosened
    # tolerance vs. the pure-f32 reference (observed error ~1e-2).
    np.testing.assert_allclose(np.asarray(out), np.asarray(ref),
                               rtol=5e-2, atol=5e-2)
    print("KERNEL_OK")
</pallas_src>

<mosaic_0001>
module attributes {stable_mosaic.version = 11 : i64} {
  func.func @cnn_gru_critic_kernel(%arg0: memref<40x256xf32, #tpu.memory_space<vmem>>, %arg1: memref<1280x384xbf16, #tpu.memory_space<vmem>>, %arg2: memref<2x128xf32, #tpu.memory_space<vmem>>) attributes {dimension_semantics = [], scalar_prefetch = 0 : i64, scratch_operands = 0 : i64, tpu.core_type = #tpu.core_type<tc>} {
    %c0 = arith.constant 0 : index
    %c0_0 = arith.constant 0 : index
    %0 = vector.load %arg0[%c0, %c0_0] : memref<40x256xf32, #tpu.memory_space<vmem>>, vector<20x192xf32>
    %1 = arith.truncf %0 : vector<20x192xf32> to vector<20x192xbf16>
    %c0_1 = arith.constant 0 : index
    %c0_2 = arith.constant 0 : index
    %2 = vector.load %arg1[%c0_1, %c0_2] : memref<1280x384xbf16, #tpu.memory_space<vmem>>, vector<192x112xbf16>
    %cst = arith.constant dense<0.000000e+00> : vector<20x112xf32>
    %3 = tpu.matmul %1, %2, %cst {dimension_numbers = #tpu.dot_dimension_numbers<[1], [0], [0], [1], [0, 0, 1, 1], [], []>} : vector<20x192xbf16>, vector<192x112xbf16>, vector<20x112xf32> -> vector<20x112xf32>
    %c192 = arith.constant 192 : index
    %c0_3 = arith.constant 0 : index
    %4 = vector.load %arg1[%c192, %c0_3] : memref<1280x384xbf16, #tpu.memory_space<vmem>>, vector<1x112xbf16>
    %5 = arith.extf %4 : vector<1x112xbf16> to vector<1x112xf32>
    %6 = vector.broadcast %5 : vector<1x112xf32> to vector<20x112xf32>
    %7 = arith.addf %3, %6 : vector<20x112xf32>
    %cst_4 = arith.constant 0.000000e+00 : f32
    %8 = vector.broadcast %cst_4 : f32 to vector<20x112xf32>
    %9 = arith.cmpf ogt, %7, %8 : vector<20x112xf32>
    %cst_5 = arith.constant 0.00999999977 : f32
    %10 = vector.broadcast %cst_5 : f32 to vector<20x112xf32>
    %11 = arith.mulf %10, %7 : vector<20x112xf32>
    %12 = arith.select %9, %7, %11 : vector<20x112xi1>, vector<20x112xf32>
    %13 = arith.truncf %12 : vector<20x112xf32> to vector<20x112xbf16>
    %14 = vector.extract_strided_slice %13 {offsets = [0, 0], sizes = [16, 112], strides = [1, 1]} : vector<20x112xbf16> to vector<16x112xbf16>
    %c208 = arith.constant 208 : index
    %c0_6 = arith.constant 0 : index
    %15 = vector.load %arg1[%c208, %c0_6] : memref<1280x384xbf16, #tpu.memory_space<vmem>>, vector<112x12xbf16>
    %cst_7 = arith.constant dense<0.000000e+00> : vector<16x12xf32>
    %16 = tpu.matmul %14, %15, %cst_7 {dimension_numbers = #tpu.dot_dimension_numbers<[1], [0], [0], [1], [0, 0, 1, 1], [], []>} : vector<16x112xbf16>, vector<112x12xbf16>, vector<16x12xf32> -> vector<16x12xf32>
    %17 = vector.extract_strided_slice %13 {offsets = [2, 0], sizes = [16, 112], strides = [1, 1]} : vector<20x112xbf16> to vector<16x112xbf16>
    %c320 = arith.constant 320 : index
    %c0_8 = arith.constant 0 : index
    %18 = vector.load %arg1[%c320, %c0_8] : memref<1280x384xbf16, #tpu.memory_space<vmem>>, vector<112x12xbf16>
    %cst_9 = arith.constant dense<0.000000e+00> : vector<16x12xf32>
    %19 = tpu.matmul %17, %18, %cst_9 {dimension_numbers = #tpu.dot_dimension_numbers<[1], [0], [0], [1], [0, 0, 1, 1], [], []>} : vector<16x112xbf16>, vector<112x12xbf16>, vector<16x12xf32> -> vector<16x12xf32>
    %20 = arith.addf %16, %19 : vector<16x12xf32>
    %21 = vector.extract_strided_slice %13 {offsets = [4, 0], sizes = [16, 112], strides = [1, 1]} : vector<20x112xbf16> to vector<16x112xbf16>
    %c432 = arith.constant 432 : index
    %c0_10 = arith.constant 0 : index
    %22 = vector.load %arg1[%c432, %c0_10] : memref<1280x384xbf16, #tpu.memory_space<vmem>>, vector<112x12xbf16>
    %cst_11 = arith.constant dense<0.000000e+00> : vector<16x12xf32>
    %23 = tpu.matmul %21, %22, %cst_11 {dimension_numbers = #tpu.dot_dimension_numbers<[1], [0], [0], [1], [0, 0, 1, 1], [], []>} : vector<16x112xbf16>, vector<112x12xbf16>, vector<16x12xf32> -> vector<16x12xf32>
    %24 = arith.addf %20, %23 : vector<16x12xf32>
    %c544 = arith.constant 544 : index
    %c0_12 = arith.constant 0 : index
    %25 = vector.load %arg1[%c544, %c0_12] : memref<1280x384xbf16, #tpu.memory_space<vmem>>, vector<1x12xbf16>
    %26 = arith.extf %25 : vector<1x12xbf16> to vector<1x12xf32>
    %27 = vector.broadcast %26 : vector<1x12xf32> to vector<16x12xf32>
    %28 = arith.addf %24, %27 : vector<16x12xf32>
    %cst_13 = arith.constant 0.000000e+00 : f32
    %29 = vector.broadcast %cst_13 : f32 to vector<16x12xf32>
    %30 = arith.cmpf ogt, %28, %29 : vector<16x12xf32>
    %cst_14 = arith.constant 0.00999999977 : f32
    %31 = vector.broadcast %cst_14 : f32 to vector<16x12xf32>
    %32 = arith.mulf %31, %28 : vector<16x12xf32>
    %33 = arith.select %30, %28, %32 : vector<16x12xi1>, vector<16x12xf32>
    %34 = arith.truncf %33 : vector<16x12xf32> to vector<16x12xbf16>
    %c560 = arith.constant 560 : index
    %c0_15 = arith.constant 0 : index
    %35 = vector.load %arg1[%c560, %c0_15] : memref<1280x384xbf16, #tpu.memory_space<vmem>>, vector<12x384xbf16>
    %cst_16 = arith.constant dense<0.000000e+00> : vector<16x384xf32>
    %36 = tpu.matmul %34, %35, %cst_16 {dimension_numbers = #tpu.dot_dimension_numbers<[1], [0], [0], [1], [0, 0, 1, 1], [], []>} : vector<16x12xbf16>, vector<12x384xbf16>, vector<16x384xf32> -> vector<16x384xf32>
    %c576 = arith.constant 576 : index
    %c0_17 = arith.constant 0 : index
    %37 = vector.load %arg1[%c576, %c0_17] : memref<1280x384xbf16, #tpu.memory_space<vmem>>, vector<1x384xbf16>
    %38 = arith.extf %37 : vector<1x384xbf16> to vector<1x384xf32>
    %39 = vector.broadcast %38 : vector<1x384xf32> to vector<16x384xf32>
    %40 = arith.addf %36, %39 : vector<16x384xf32>
    %c592 = arith.constant 592 : index
    %c0_18 = arith.constant 0 : index
    %41 = vector.load %arg1[%c592, %c0_18] : memref<1280x384xbf16, #tpu.memory_space<vmem>>, vector<128x384xbf16>
    %c720 = arith.constant 720 : index
    %c0_19 = arith.constant 0 : index
    %42 = vector.load %arg1[%c720, %c0_19] : memref<1280x384xbf16, #tpu.memory_space<vmem>>, vector<1x384xbf16>
    %43 = arith.extf %42 : vector<1x384xbf16> to vector<1x384xf32>
    %cst_20 = arith.constant 0.000000e+00 : f32
    %44 = vector.broadcast %cst_20 : f32 to vector<2x128xf32>
    %45 = vector.extract_strided_slice %40 {offsets = [0, 0], sizes = [2, 384], strides = [1, 1]} : vector<16x384xf32> to vector<2x384xf32>
    %46 = arith.truncf %44 : vector<2x128xf32> to vector<2x128xbf16>
    %cst_21 = arith.constant dense<0.000000e+00> : vector<2x384xf32>
    %47 = tpu.matmul %46, %41, %cst_21 {dimension_numbers = #tpu.dot_dimension_numbers<[1], [0], [0], [1], [0, 0, 1, 1], [], []>} : vector<2x128xbf16>, vector<128x384xbf16>, vector<2x384xf32> -> vector<2x384xf32>
    %48 = vector.broadcast %43 : vector<1x384xf32> to vector<2x384xf32>
    %49 = arith.addf %47, %48 : vector<2x384xf32>
    %50 = vector.extract_strided_slice %45 {offsets = [0, 0], sizes = [2, 128], strides = [1, 1]} : vector<2x384xf32> to vector<2x128xf32>
    %51 = vector.extract_strided_slice %49 {offsets = [0, 0], sizes = [2, 128], strides = [1, 1]} : vector<2x384xf32> to vector<2x128xf32>
    %52 = arith.addf %50, %51 : vector<2x128xf32>
    %53 = arith.negf %52 : vector<2x128xf32>
    %54 = math.exp %53 : vector<2x128xf32>
    %cst_22 = arith.constant 1.000000e+00 : f32
    %55 = vector.broadcast %cst_22 : f32 to vector<2x128xf32>
    %56 = arith.addf %55, %54 : vector<2x128xf32>
    %57 = arith.divf %55, %56 : vector<2x128xf32>
    %58 = vector.extract_strided_slice %45 {offsets = [0, 128], sizes = [2, 128], strides = [1, 1]} : vector<2x384xf32> to vector<2x128xf32>
    %59 = vector.extract_strided_slice %49 {offsets = [0, 128], sizes = [2, 128], strides = [1, 1]} : vector<2x384xf32> to vector<2x128xf32>
    %60 = arith.addf %58, %59 : vector<2x128xf32>
    %61 = arith.negf %60 : vector<2x128xf32>
    %62 = math.exp %61 : vector<2x128xf32>
    %cst_23 = arith.constant 1.000000e+00 : f32
    %63 = vector.broadcast %cst_23 : f32 to vector<2x128xf32>
    %64 = arith.addf %63, %62 : vector<2x128xf32>
    %65 = arith.divf %63, %64 : vector<2x128xf32>
    %66 = vector.extract_strided_slice %45 {offsets = [0, 256], sizes = [2, 128], strides = [1, 1]} : vector<2x384xf32> to vector<2x128xf32>
    %67 = vector.extract_strided_slice %49 {offsets = [0, 256], sizes = [2, 128], strides = [1, 1]} : vector<2x384xf32> to vector<2x128xf32>
    %68 = arith.mulf %57, %67 : vector<2x128xf32>
    %69 = arith.addf %66, %68 : vector<2x128xf32>
    %70 = math.tanh %69 : vector<2x128xf32>
    %cst_24 = arith.constant 1.000000e+00 : f32
    %71 = vector.broadcast %cst_24 : f32 to vector<2x128xf32>
    %72 = arith.subf %71, %65 : vector<2x128xf32>
    %73 = arith.mulf %72, %70 : vector<2x128xf32>
    %74 = arith.mulf %65, %44 : vector<2x128xf32>
    %75 = arith.addf %73, %74 : vector<2x128xf32>
    %76 = vector.extract_strided_slice %40 {offsets = [2, 0], sizes = [2, 384], strides = [1, 1]} : vector<16x384xf32> to vector<2x384xf32>
    %77 = arith.truncf %75 : vector<2x128xf32> to vector<2x128xbf16>
    %cst_25 = arith.constant dense<0.000000e+00> : vector<2x384xf32>
    %78 = tpu.matmul %77, %41, %cst_25 {dimension_numbers = #tpu.dot_dimension_numbers<[1], [0], [0], [1], [0, 0, 1, 1], [], []>} : vector<2x128xbf16>, vector<128x384xbf16>, vector<2x384xf32> -> vector<2x384xf32>
    %79 = vector.broadcast %43 : vector<1x384xf32> to vector<2x384xf32>
    %80 = arith.addf %78, %79 : vector<2x384xf32>
    %81 = vector.extract_strided_slice %76 {offsets = [0, 0], sizes = [2, 128], strides = [1, 1]} : vector<2x384xf32> to vector<2x128xf32>
    %82 = vector.extract_strided_slice %80 {offsets = [0, 0], sizes = [2, 128], strides = [1, 1]} : vector<2x384xf32> to vector<2x128xf32>
    %83 = arith.addf %81, %82 : vector<2x128xf32>
    %84 = arith.negf %83 : vector<2x128xf32>
    %85 = math.exp %84 : vector<2x128xf32>
    %cst_26 = arith.constant 1.000000e+00 : f32
    %86 = vector.broadcast %cst_26 : f32 to vector<2x128xf32>
    %87 = arith.addf %86, %85 : vector<2x128xf32>
    %88 = arith.divf %86, %87 : vector<2x128xf32>
    %89 = vector.extract_strided_slice %76 {offsets = [0, 128], sizes = [2, 128], strides = [1, 1]} : vector<2x384xf32> to vector<2x128xf32>
    %90 = vector.extract_strided_slice %80 {offsets = [0, 128], sizes = [2, 128], strides = [1, 1]} : vector<2x384xf32> to vector<2x128xf32>
    %91 = arith.addf %89, %90 : vector<2x128xf32>
    %92 = arith.negf %91 : vector<2x128xf32>
    %93 = math.exp %92 : vector<2x128xf32>
    %cst_27 = arith.constant 1.000000e+00 : f32
    %94 = vector.broadcast %cst_27 : f32 to vector<2x128xf32>
    %95 = arith.addf %94, %93 : vector<2x128xf32>
    %96 = arith.divf %94, %95 : vector<2x128xf32>
    %97 = vector.extract_strided_slice %76 {offsets = [0, 256], sizes = [2, 128], strides = [1, 1]} : vector<2x384xf32> to vector<2x128xf32>
    %98 = vector.extract_strided_slice %80 {offsets = [0, 256], sizes = [2, 128], strides = [1, 1]} : vector<2x384xf32> to vector<2x128xf32>
    %99 = arith.mulf %88, %98 : vector<2x128xf32>
    %100 = arith.addf %97, %99 : vector<2x128xf32>
    %101 = math.tanh %100 : vector<2x128xf32>
    %cst_28 = arith.constant 1.000000e+00 : f32
    %102 = vector.broadcast %cst_28 : f32 to vector<2x128xf32>
    %103 = arith.subf %102, %96 : vector<2x128xf32>
    %104 = arith.mulf %103, %101 : vector<2x128xf32>
    %105 = arith.mulf %96, %75 : vector<2x128xf32>
    %106 = arith.addf %104, %105 : vector<2x128xf32>
    %107 = vector.extract_strided_slice %40 {offsets = [4, 0], sizes = [2, 384], strides = [1, 1]} : vector<16x384xf32> to vector<2x384xf32>
    %108 = arith.truncf %106 : vector<2x128xf32> to vector<2x128xbf16>
    %cst_29 = arith.constant dense<0.000000e+00> : vector<2x384xf32>
    %109 = tpu.matmul %108, %41, %cst_29 {dimension_numbers = #tpu.dot_dimension_numbers<[1], [0], [0], [1], [0, 0, 1, 1], [], []>} : vector<2x128xbf16>, vector<128x384xbf16>, vector<2x384xf32> -> vector<2x384xf32>
    %110 = vector.broadcast %43 : vector<1x384xf32> to vector<2x384xf32>
    %111 = arith.addf %109, %110 : vector<2x384xf32>
    %112 = vector.extract_strided_slice %107 {offsets = [0, 0], sizes = [2, 128], strides = [1, 1]} : vector<2x384xf32> to vector<2x128xf32>
    %113 = vector.extract_strided_slice %111 {offsets = [0, 0], sizes = [2, 128], strides = [1, 1]} : vector<2x384xf32> to vector<2x128xf32>
    %114 = arith.addf %112, %113 : vector<2x128xf32>
    %115 = arith.negf %114 : vector<2x128xf32>
    %116 = math.exp %115 : vector<2x128xf32>
    %cst_30 = arith.constant 1.000000e+00 : f32
    %117 = vector.broadcast %cst_30 : f32 to vector<2x128xf32>
    %118 = arith.addf %117, %116 : vector<2x128xf32>
    %119 = arith.divf %117, %118 : vector<2x128xf32>
    %120 = vector.extract_strided_slice %107 {offsets = [0, 128], sizes = [2, 128], strides = [1, 1]} : vector<2x384xf32> to vector<2x128xf32>
    %121 = vector.extract_strided_slice %111 {offsets = [0, 128], sizes = [2, 128], strides = [1, 1]} : vector<2x384xf32> to vector<2x128xf32>
    %122 = arith.addf %120, %121 : vector<2x128xf32>
    %123 = arith.negf %122 : vector<2x128xf32>
    %124 = math.exp %123 : vector<2x128xf32>
    %cst_31 = arith.constant 1.000000e+00 : f32
    %125 = vector.broadcast %cst_31 : f32 to vector<2x128xf32>
    %126 = arith.addf %125, %124 : vector<2x128xf32>
    %127 = arith.divf %125, %126 : vector<2x128xf32>
    %128 = vector.extract_strided_slice %107 {offsets = [0, 256], sizes = [2, 128], strides = [1, 1]} : vector<2x384xf32> to vector<2x128xf32>
    %129 = vector.extract_strided_slice %111 {offsets = [0, 256], sizes = [2, 128], strides = [1, 1]} : vector<2x384xf32> to vector<2x128xf32>
    %130 = arith.mulf %119, %129 : vector<2x128xf32>
    %131 = arith.addf %128, %130 : vector<2x128xf32>
    %132 = math.tanh %131 : vector<2x128xf32>
    %cst_32 = arith.constant 1.000000e+00 : f32
    %133 = vector.broadcast %cst_32 : f32 to vector<2x128xf32>
    %134 = arith.subf %133, %127 : vector<2x128xf32>
    %135 = arith.mulf %134, %132 : vector<2x128xf32>
    %136 = arith.mulf %127, %106 : vector<2x128xf32>
    %137 = arith.addf %135, %136 : vector<2x128xf32>
    %138 = vector.extract_strided_slice %40 {offsets = [6, 0], sizes = [2, 384], strides = [1, 1]} : vector<16x384xf32> to vector<2x384xf32>
    %139 = arith.truncf %137 : vector<2x128xf32> to vector<2x128xbf16>
    %cst_33 = arith.constant dense<0.000000e+00> : vector<2x384xf32>
    %140 = tpu.matmul %139, %41, %cst_33 {dimension_numbers = #tpu.dot_dimension_numbers<[1], [0], [0], [1], [0, 0, 1, 1], [], []>} : vector<2x128xbf16>, vector<128x384xbf16>, vector<2x384xf32> -> vector<2x384xf32>
    %141 = vector.broadcast %43 : vector<1x384xf32> to vector<2x384xf32>
    %142 = arith.addf %140, %141 : vector<2x384xf32>
    %143 = vector.extract_strided_slice %138 {offsets = [0, 0], sizes = [2, 128], strides = [1, 1]} : vector<2x384xf32> to vector<2x128xf32>
    %144 = vector.extract_strided_slice %142 {offsets = [0, 0], sizes = [2, 128], strides = [1, 1]} : vector<2x384xf32> to vector<2x128xf32>
    %145 = arith.addf %143, %144 : vector<2x128xf32>
    %146 = arith.negf %145 : vector<2x128xf32>
    %147 = math.exp %146 : vector<2x128xf32>
    %cst_34 = arith.constant 1.000000e+00 : f32
    %148 = vector.broadcast %cst_34 : f32 to vector<2x128xf32>
    %149 = arith.addf %148, %147 : vector<2x128xf32>
    %150 = arith.divf %148, %149 : vector<2x128xf32>
    %151 = vector.extract_strided_slice %138 {offsets = [0, 128], sizes = [2, 128], strides = [1, 1]} : vector<2x384xf32> to vector<2x128xf32>
    %152 = vector.extract_strided_slice %142 {offsets = [0, 128], sizes = [2, 128], strides = [1, 1]} : vector<2x384xf32> to vector<2x128xf32>
    %153 = arith.addf %151, %152 : vector<2x128xf32>
    %154 = arith.negf %153 : vector<2x128xf32>
    %155 = math.exp %154 : vector<2x128xf32>
    %cst_35 = arith.constant 1.000000e+00 : f32
    %156 = vector.broadcast %cst_35 : f32 to vector<2x128xf32>
    %157 = arith.addf %156, %155 : vector<2x128xf32>
    %158 = arith.divf %156, %157 : vector<2x128xf32>
    %159 = vector.extract_strided_slice %138 {offsets = [0, 256], sizes = [2, 128], strides = [1, 1]} : vector<2x384xf32> to vector<2x128xf32>
    %160 = vector.extract_strided_slice %142 {offsets = [0, 256], sizes = [2, 128], strides = [1, 1]} : vector<2x384xf32> to vector<2x128xf32>
    %161 = arith.mulf %150, %160 : vector<2x128xf32>
    %162 = arith.addf %159, %161 : vector<2x128xf32>
    %163 = math.tanh %162 : vector<2x128xf32>
    %cst_36 = arith.constant 1.000000e+00 : f32
    %164 = vector.broadcast %cst_36 : f32 to vector<2x128xf32>
    %165 = arith.subf %164, %158 : vector<2x128xf32>
    %166 = arith.mulf %165, %163 : vector<2x128xf32>
    %167 = arith.mulf %158, %137 : vector<2x128xf32>
    %168 = arith.addf %166, %167 : vector<2x128xf32>
    %169 = vector.extract_strided_slice %40 {offsets = [8, 0], sizes = [2, 384], strides = [1, 1]} : vector<16x384xf32> to vector<2x384xf32>
    %170 = arith.truncf %168 : vector<2x128xf32> to vector<2x128xbf16>
    %cst_37 = arith.constant dense<0.000000e+00> : vector<2x384xf32>
    %171 = tpu.matmul %170, %41, %cst_37 {dimension_numbers = #tpu.dot_dimension_numbers<[1], [0], [0], [1], [0, 0, 1, 1], [], []>} : vector<2x128xbf16>, vector<128x384xbf16>, vector<2x384xf32> -> vector<2x384xf32>
    %172 = vector.broadcast %43 : vector<1x384xf32> to vector<2x384xf32>
    %173 = arith.addf %171, %172 : vector<2x384xf32>
    %174 = vector.extract_strided_slice %169 {offsets = [0, 0], sizes = [2, 128], strides = [1, 1]} : vector<2x384xf32> to vector<2x128xf32>
    %175 = vector.extract_strided_slice %173 {offsets = [0, 0], sizes = [2, 128], strides = [1, 1]} : vector<2x384xf32> to vector<2x128xf32>
    %176 = arith.addf %174, %175 : vector<2x128xf32>
    %177 = arith.negf %176 : vector<2x128xf32>
    %178 = math.exp %177 : vector<2x128xf32>
    %cst_38 = arith.constant 1.000000e+00 : f32
    %179 = vector.broadcast %cst_38 : f32 to vector<2x128xf32>
    %180 = arith.addf %179, %178 : vector<2x128xf32>
    %181 = arith.divf %179, %180 : vector<2x128xf32>
    %182 = vector.extract_strided_slice %169 {offsets = [0, 128], sizes = [2, 128], strides = [1, 1]} : vector<2x384xf32> to vector<2x128xf32>
    %183 = vector.extract_strided_slice %173 {offsets = [0, 128], sizes = [2, 128], strides = [1, 1]} : vector<2x384xf32> to vector<2x128xf32>
    %184 = arith.addf %182, %183 : vector<2x128xf32>
    %185 = arith.negf %184 : vector<2x128xf32>
    %186 = math.exp %185 : vector<2x128xf32>
    %cst_39 = arith.constant 1.000000e+00 : f32
    %187 = vector.broadcast %cst_39 : f32 to vector<2x128xf32>
    %188 = arith.addf %187, %186 : vector<2x128xf32>
    %189 = arith.divf %187, %188 : vector<2x128xf32>
    %190 = vector.extract_strided_slice %169 {offsets = [0, 256], sizes = [2, 128], strides = [1, 1]} : vector<2x384xf32> to vector<2x128xf32>
    %191 = vector.extract_strided_slice %173 {offsets = [0, 256], sizes = [2, 128], strides = [1, 1]} : vector<2x384xf32> to vector<2x128xf32>
    %192 = arith.mulf %181, %191 : vector<2x128xf32>
    %193 = arith.addf %190, %192 : vector<2x128xf32>
    %194 = math.tanh %193 : vector<2x128xf32>
    %cst_40 = arith.constant 1.000000e+00 : f32
    %195 = vector.broadcast %cst_40 : f32 to vector<2x128xf32>
    %196 = arith.subf %195, %189 : vector<2x128xf32>
    %197 = arith.mulf %196, %194 : vector<2x128xf32>
    %198 = arith.mulf %189, %168 : vector<2x128xf32>
    %199 = arith.addf %197, %198 : vector<2x128xf32>
    %200 = vector.extract_strided_slice %40 {offsets = [10, 0], sizes = [2, 384], strides = [1, 1]} : vector<16x384xf32> to vector<2x384xf32>
    %201 = arith.truncf %199 : vector<2x128xf32> to vector<2x128xbf16>
    %cst_41 = arith.constant dense<0.000000e+00> : vector<2x384xf32>
    %202 = tpu.matmul %201, %41, %cst_41 {dimension_numbers = #tpu.dot_dimension_numbers<[1], [0], [0], [1], [0, 0, 1, 1], [], []>} : vector<2x128xbf16>, vector<128x384xbf16>, vector<2x384xf32> -> vector<2x384xf32>
    %203 = vector.broadcast %43 : vector<1x384xf32> to vector<2x384xf32>
    %204 = arith.addf %202, %203 : vector<2x384xf32>
    %205 = vector.extract_strided_slice %200 {offsets = [0, 0], sizes = [2, 128], strides = [1, 1]} : vector<2x384xf32> to vector<2x128xf32>
    %206 = vector.extract_strided_slice %204 {offsets = [0, 0], sizes = [2, 128], strides = [1, 1]} : vector<2x384xf32> to vector<2x128xf32>
    %207 = arith.addf %205, %206 : vector<2x128xf32>
    %208 = arith.negf %207 : vector<2x128xf32>
    %209 = math.exp %208 : vector<2x128xf32>
    %cst_42 = arith.constant 1.000000e+00 : f32
    %210 = vector.broadcast %cst_42 : f32 to vector<2x128xf32>
    %211 = arith.addf %210, %209 : vector<2x128xf32>
    %212 = arith.divf %210, %211 : vector<2x128xf32>
    %213 = vector.extract_strided_slice %200 {offsets = [0, 128], sizes = [2, 128], strides = [1, 1]} : vector<2x384xf32> to vector<2x128xf32>
    %214 = vector.extract_strided_slice %204 {offsets = [0, 128], sizes = [2, 128], strides = [1, 1]} : vector<2x384xf32> to vector<2x128xf32>
    %215 = arith.addf %213, %214 : vector<2x128xf32>
    %216 = arith.negf %215 : vector<2x128xf32>
    %217 = math.exp %216 : vector<2x128xf32>
    %cst_43 = arith.constant 1.000000e+00 : f32
    %218 = vector.broadcast %cst_43 : f32 to vector<2x128xf32>
    %219 = arith.addf %218, %217 : vector<2x128xf32>
    %220 = arith.divf %218, %219 : vector<2x128xf32>
    %221 = vector.extract_strided_slice %200 {offsets = [0, 256], sizes = [2, 128], strides = [1, 1]} : vector<2x384xf32> to vector<2x128xf32>
    %222 = vector.extract_strided_slice %204 {offsets = [0, 256], sizes = [2, 128], strides = [1, 1]} : vector<2x384xf32> to vector<2x128xf32>
    %223 = arith.mulf %212, %222 : vector<2x128xf32>
    %224 = arith.addf %221, %223 : vector<2x128xf32>
    %225 = math.tanh %224 : vector<2x128xf32>
    %cst_44 = arith.constant 1.000000e+00 : f32
    %226 = vector.broadcast %cst_44 : f32 to vector<2x128xf32>
    %227 = arith.subf %226, %220 : vector<2x128xf32>
    %228 = arith.mulf %227, %225 : vector<2x128xf32>
    %229 = arith.mulf %220, %199 : vector<2x128xf32>
    %230 = arith.addf %228, %229 : vector<2x128xf32>
    %231 = vector.extract_strided_slice %40 {offsets = [12, 0], sizes = [2, 384], strides = [1, 1]} : vector<16x384xf32> to vector<2x384xf32>
    %232 = arith.truncf %230 : vector<2x128xf32> to vector<2x128xbf16>
    %cst_45 = arith.constant dense<0.000000e+00> : vector<2x384xf32>
    %233 = tpu.matmul %232, %41, %cst_45 {dimension_numbers = #tpu.dot_dimension_numbers<[1], [0], [0], [1], [0, 0, 1, 1], [], []>} : vector<2x128xbf16>, vector<128x384xbf16>, vector<2x384xf32> -> vector<2x384xf32>
    %234 = vector.broadcast %43 : vector<1x384xf32> to vector<2x384xf32>
    %235 = arith.addf %233, %234 : vector<2x384xf32>
    %236 = vector.extract_strided_slice %231 {offsets = [0, 0], sizes = [2, 128], strides = [1, 1]} : vector<2x384xf32> to vector<2x128xf32>
    %237 = vector.extract_strided_slice %235 {offsets = [0, 0], sizes = [2, 128], strides = [1, 1]} : vector<2x384xf32> to vector<2x128xf32>
    %238 = arith.addf %236, %237 : vector<2x128xf32>
    %239 = arith.negf %238 : vector<2x128xf32>
    %240 = math.exp %239 : vector<2x128xf32>
    %cst_46 = arith.constant 1.000000e+00 : f32
    %241 = vector.broadcast %cst_46 : f32 to vector<2x128xf32>
    %242 = arith.addf %241, %240 : vector<2x128xf32>
    %243 = arith.divf %241, %242 : vector<2x128xf32>
    %244 = vector.extract_strided_slice %231 {offsets = [0, 128], sizes = [2, 128], strides = [1, 1]} : vector<2x384xf32> to vector<2x128xf32>
    %245 = vector.extract_strided_slice %235 {offsets = [0, 128], sizes = [2, 128], strides = [1, 1]} : vector<2x384xf32> to vector<2x128xf32>
    %246 = arith.addf %244, %245 : vector<2x128xf32>
    %247 = arith.negf %246 : vector<2x128xf32>
    %248 = math.exp %247 : vector<2x128xf32>
    %cst_47 = arith.constant 1.000000e+00 : f32
    %249 = vector.broadcast %cst_47 : f32 to vector<2x128xf32>
    %250 = arith.addf %249, %248 : vector<2x128xf32>
    %251 = arith.divf %249, %250 : vector<2x128xf32>
    %252 = vector.extract_strided_slice %231 {offsets = [0, 256], sizes = [2, 128], strides = [1, 1]} : vector<2x384xf32> to vector<2x128xf32>
    %253 = vector.extract_strided_slice %235 {offsets = [0, 256], sizes = [2, 128], strides = [1, 1]} : vector<2x384xf32> to vector<2x128xf32>
    %254 = arith.mulf %243, %253 : vector<2x128xf32>
    %255 = arith.addf %252, %254 : vector<2x128xf32>
    %256 = math.tanh %255 : vector<2x128xf32>
    %cst_48 = arith.constant 1.000000e+00 : f32
    %257 = vector.broadcast %cst_48 : f32 to vector<2x128xf32>
    %258 = arith.subf %257, %251 : vector<2x128xf32>
    %259 = arith.mulf %258, %256 : vector<2x128xf32>
    %260 = arith.mulf %251, %230 : vector<2x128xf32>
    %261 = arith.addf %259, %260 : vector<2x128xf32>
    %262 = vector.extract_strided_slice %40 {offsets = [14, 0], sizes = [2, 384], strides = [1, 1]} : vector<16x384xf32> to vector<2x384xf32>
    %263 = arith.truncf %261 : vector<2x128xf32> to vector<2x128xbf16>
    %cst_49 = arith.constant dense<0.000000e+00> : vector<2x384xf32>
    %264 = tpu.matmul %263, %41, %cst_49 {dimension_numbers = #tpu.dot_dimension_numbers<[1], [0], [0], [1], [0, 0, 1, 1], [], []>} : vector<2x128xbf16>, vector<128x384xbf16>, vector<2x384xf32> -> vector<2x384xf32>
    %265 = vector.broadcast %43 : vector<1x384xf32> to vector<2x384xf32>
    %266 = arith.addf %264, %265 : vector<2x384xf32>
    %267 = vector.extract_strided_slice %262 {offsets = [0, 0], sizes = [2, 128], strides = [1, 1]} : vector<2x384xf32> to vector<2x128xf32>
    %268 = vector.extract_strided_slice %266 {offsets = [0, 0], sizes = [2, 128], strides = [1, 1]} : vector<2x384xf32> to vector<2x128xf32>
    %269 = arith.addf %267, %268 : vector<2x128xf32>
    %270 = arith.negf %269 : vector<2x128xf32>
    %271 = math.exp %270 : vector<2x128xf32>
    %cst_50 = arith.constant 1.000000e+00 : f32
    %272 = vector.broadcast %cst_50 : f32 to vector<2x128xf32>
    %273 = arith.addf %272, %271 : vector<2x128xf32>
    %274 = arith.divf %272, %273 : vector<2x128xf32>
    %275 = vector.extract_strided_slice %262 {offsets = [0, 128], sizes = [2, 128], strides = [1, 1]} : vector<2x384xf32> to vector<2x128xf32>
    %276 = vector.extract_strided_slice %266 {offsets = [0, 128], sizes = [2, 128], strides = [1, 1]} : vector<2x384xf32> to vector<2x128xf32>
    %277 = arith.addf %275, %276 : vector<2x128xf32>
    %278 = arith.negf %277 : vector<2x128xf32>
    %279 = math.exp %278 : vector<2x128xf32>
    %cst_51 = arith.constant 1.000000e+00 : f32
    %280 = vector.broadcast %cst_51 : f32 to vector<2x128xf32>
    %281 = arith.addf %280, %279 : vector<2x128xf32>
    %282 = arith.divf %280, %281 : vector<2x128xf32>
    %283 = vector.extract_strided_slice %262 {offsets = [0, 256], sizes = [2, 128], strides = [1, 1]} : vector<2x384xf32> to vector<2x128xf32>
    %284 = vector.extract_strided_slice %266 {offsets = [0, 256], sizes = [2, 128], strides = [1, 1]} : vector<2x384xf32> to vector<2x128xf32>
    %285 = arith.mulf %274, %284 : vector<2x128xf32>
    %286 = arith.addf %283, %285 : vector<2x128xf32>
    %287 = math.tanh %286 : vector<2x128xf32>
    %cst_52 = arith.constant 1.000000e+00 : f32
    %288 = vector.broadcast %cst_52 : f32 to vector<2x128xf32>
    %289 = arith.subf %288, %282 : vector<2x128xf32>
    %290 = arith.mulf %289, %287 : vector<2x128xf32>
    %291 = arith.mulf %282, %261 : vector<2x128xf32>
    %292 = arith.addf %290, %291 : vector<2x128xf32>
    %cst_53 = arith.constant 0.000000e+00 : f32
    %293 = vector.broadcast %cst_53 : f32 to vector<2x128xf32>
    %294 = arith.cmpf ogt, %292, %293 : vector<2x128xf32>
    %cst_54 = arith.constant 0.00999999977 : f32
    %295 = vector.broadcast %cst_54 : f32 to vector<2x128xf32>
    %296 = arith.mulf %295, %292 : vector<2x128xf32>
    %297 = arith.select %294, %292, %296 : vector<2x128xi1>, vector<2x128xf32>
    %298 = arith.truncf %297 : vector<2x128xf32> to vector<2x128xbf16>
    %c24 = arith.constant 24 : index
    %c0_55 = arith.constant 0 : index
    %299 = vector.load %arg0[%c24, %c0_55] : memref<40x256xf32, #tpu.memory_space<vmem>>, vector<2x128xf32>
    %300 = arith.truncf %299 : vector<2x128xf32> to vector<2x128xbf16>
    %c32 = arith.constant 32 : index
    %c0_56 = arith.constant 0 : index
    %301 = vector.load %arg0[%c32, %c0_56] : memref<40x256xf32, #tpu.memory_space<vmem>>, vector<2x128xf32>
    %302 = arith.truncf %301 : vector<2x128xf32> to vector<2x128xbf16>
    %c736 = arith.constant 736 : index
    %c0_57 = arith.constant 0 : index
    %303 = vector.load %arg1[%c736, %c0_57] : memref<1280x384xbf16, #tpu.memory_space<vmem>>, vector<128x128xbf16>
    %cst_58 = arith.constant dense<0.000000e+00> : vector<2x128xf32>
    %304 = tpu.matmul %298, %303, %cst_58 {dimension_numbers = #tpu.dot_dimension_numbers<[1], [0], [0], [1], [0, 0, 1, 1], [], []>} : vector<2x128xbf16>, vector<128x128xbf16>, vector<2x128xf32> -> vector<2x128xf32>
    %c864 = arith.constant 864 : index
    %c0_59 = arith.constant 0 : index
    %305 = vector.load %arg1[%c864, %c0_59] : memref<1280x384xbf16, #tpu.memory_space<vmem>>, vector<128x128xbf16>
    %cst_60 = arith.constant dense<0.000000e+00> : vector<2x128xf32>
    %306 = tpu.matmul %300, %305, %cst_60 {dimension_numbers = #tpu.dot_dimension_numbers<[1], [0], [0], [1], [0, 0, 1, 1], [], []>} : vector<2x128xbf16>, vector<128x128xbf16>, vector<2x128xf32> -> vector<2x128xf32>
    %307 = arith.addf %304, %306 : vector<2x128xf32>
    %c992 = arith.constant 992 : index
    %c0_61 = arith.constant 0 : index
    %308 = vector.load %arg1[%c992, %c0_61] : memref<1280x384xbf16, #tpu.memory_space<vmem>>, vector<1x128xbf16>
    %309 = arith.extf %308 : vector<1x128xbf16> to vector<1x128xf32>
    %310 = vector.broadcast %309 : vector<1x128xf32> to vector<2x128xf32>
    %311 = arith.addf %307, %310 : vector<2x128xf32>
    %cst_62 = arith.constant 0.000000e+00 : f32
    %312 = vector.broadcast %cst_62 : f32 to vector<2x128xf32>
    %313 = arith.cmpf ogt, %311, %312 : vector<2x128xf32>
    %cst_63 = arith.constant 0.00999999977 : f32
    %314 = vector.broadcast %cst_63 : f32 to vector<2x128xf32>
    %315 = arith.mulf %314, %311 : vector<2x128xf32>
    %316 = arith.select %313, %311, %315 : vector<2x128xi1>, vector<2x128xf32>
    %317 = arith.truncf %316 : vector<2x128xf32> to vector<2x128xbf16>
    %c1008 = arith.constant 1008 : index
    %c0_64 = arith.constant 0 : index
    %318 = vector.load %arg1[%c1008, %c0_64] : memref<1280x384xbf16, #tpu.memory_space<vmem>>, vector<128x128xbf16>
    %cst_65 = arith.constant dense<0.000000e+00> : vector<2x128xf32>
    %319 = tpu.matmul %317, %318, %cst_65 {dimension_numbers = #tpu.dot_dimension_numbers<[1], [0], [0], [1], [0, 0, 1, 1], [], []>} : vector<2x128xbf16>, vector<128x128xbf16>, vector<2x128xf32> -> vector<2x128xf32>
    %c1136 = arith.constant 1136 : index
    %c0_66 = arith.constant 0 : index
    %320 = vector.load %arg1[%c1136, %c0_66] : memref<1280x384xbf16, #tpu.memory_space<vmem>>, vector<128x128xbf16>
    %cst_67 = arith.constant dense<0.000000e+00> : vector<2x128xf32>
    %321 = tpu.matmul %302, %320, %cst_67 {dimension_numbers = #tpu.dot_dimension_numbers<[1], [0], [0], [1], [0, 0, 1, 1], [], []>} : vector<2x128xbf16>, vector<128x128xbf16>, vector<2x128xf32> -> vector<2x128xf32>
    %322 = arith.addf %319, %321 : vector<2x128xf32>
    %c1264 = arith.constant 1264 : index
    %c0_68 = arith.constant 0 : index
    %323 = vector.load %arg1[%c1264, %c0_68] : memref<1280x384xbf16, #tpu.memory_space<vmem>>, vector<1x128xbf16>
    %324 = arith.extf %323 : vector<1x128xbf16> to vector<1x128xf32>
    %325 = vector.broadcast %324 : vector<1x128xf32> to vector<2x128xf32>
    %326 = arith.addf %322, %325 : vector<2x128xf32>
    %cst_69 = arith.constant 0.000000e+00 : f32
    %327 = vector.broadcast %cst_69 : f32 to vector<2x128xf32>
    %328 = arith.cmpf ogt, %326, %327 : vector<2x128xf32>
    %cst_70 = arith.constant 0.00999999977 : f32
    %329 = vector.broadcast %cst_70 : f32 to vector<2x128xf32>
    %330 = arith.mulf %329, %326 : vector<2x128xf32>
    %331 = arith.select %328, %326, %330 : vector<2x128xi1>, vector<2x128xf32>
    %c0_71 = arith.constant 0 : index
    %c0_72 = arith.constant 0 : index
    %332 = vector.load %arg2[%c0_71, %c0_72] : memref<2x128xf32, #tpu.memory_space<vmem>>, vector<2x128xf32>
    tpu.vector_store %arg2[%c0_71, %c0_72], %331 {strides = array<i32>} : memref<2x128xf32, #tpu.memory_space<vmem>>, vector<2x128xf32>,
    return
  }
}

</mosaic_0001>

<llo_original>
// kernel: tpu_custom_call.1
$region0: #{tpu_custom_call.1}
  #allocation0 [shape = 'u32[]', space=smem, size = 0x4, offset = 0x4, fixed_abs, tag = 'smem constant byte address 0x4 - core index']
  #allocation1 [shape = 'u32[144,128]{1,0:T(1,128)}', space=vmem, size = 0x12000, scoped, tag = 'internal scratch']
  %s0 = inlined_call_operand.hbm [shape: f32[40,256], index: 0, kind: input, shape index: {}]
  %s1 = inlined_call_operand.hbm [shape: bf16[1280,384], index: 1, kind: input, shape index: {}]
  %s2 = inlined_call_operand.hbm [shape: f32[2,128], index: 2, kind: output, shape index: {}]
  %s3 = sld [smem:[#allocation0]]
  $region26: #{tpu_custom_call.1} parent=0
    _
  %s5 = ssub.s32 1, %s3
  %s6 = scalar_select 0, %s5, %s3
  $region1: #{tpu_custom_call.1} parent=0
    #allocation2 [shape = 'u8[40960]{0}', space=vmem, size = 0xa000, scoped, tag = 'input window, operand 0, single buffered']
    #allocation3 [shape = 's32[1]{0}', space=sflag, size = 0x4, scoped, tag = 'scoped memory for tpu_custom_call.1']
    #allocation4 [shape = 's32[1]{0}', space=sflag, size = 0x4, scoped, tag = 'scoped memory for tpu_custom_call.1']
    #allocation5 [shape = 'u8[983040]{0}', space=vmem, size = 0xf0000, scoped, tag = 'input window, operand 1, single buffered']
    #allocation6 [shape = 's32[1]{0}', space=sflag, size = 0x4, scoped, tag = 'scoped memory for tpu_custom_call.1']
    #allocation7 [shape = 'u8[1024]{0}', space=vmem, size = 0x400, scoped, tag = 'output window, operand 0, single buffered']
    %7 = vsyncpa [#allocation3], 0
    %8 = vsyncpa [#allocation6], 0
    %9 = vsyncpa [#allocation4], 0
    // Predicated region
    $region2: #{tpu_custom_call.1} parent=1 // pred_check
      _
    $region3: #{tpu_custom_call.1} parent=1 // pred_check_branch
      %11 = sbr.rel (0) target = $region5
    $region4: #{tpu_custom_call.1} parent=1 // pred_region
      %s13 = ssub.s32 1280, 1280
      %14 = vsyncadd [#allocation3], %s13
      %s15 = sshll.u32 [#allocation2], 4
      %s16 = int_to_ptr.vmem [resolvable:$true] %s15
      %21 = dma.hbm_to_vmem [thread:$0]  %s0, 1280, %s16, [#allocation3], 256, 256, 16
    $region5: #{tpu_custom_call.1} parent=1 // pred_fallthru
      _
    // Predicated region
    $region6: #{tpu_custom_call.1} parent=1 // pred_check
      _
    $region7: #{tpu_custom_call.1} parent=1 // pred_check_branch
      %23 = sbr.rel (0) target = $region9
    $region8: #{tpu_custom_call.1} parent=1 // pred_region
      %s25 = ssub.s32 30720, 30720
      %26 = vsyncadd [#allocation6], %s25
      %s27 = sshll.u32 [#allocation5], 4
      %s28 = int_to_ptr.vmem [resolvable:$true] %s27
      %33 = dma.hbm_to_vmem [thread:$0]  %s1, 30720, %s28, [#allocation6], 192, 192, 12
    $region9: #{tpu_custom_call.1} parent=1 // pred_fallthru
      _
    // Predicated region
    $region10: #{tpu_custom_call.1} parent=1 // pred_check
      _
    $region11: #{tpu_custom_call.1} parent=1 // pred_check_branch
      %35 = sbr.rel (0) target = $region13
    $region12: #{tpu_custom_call.1} parent=1 // pred_region
      %36 = dma.done [#allocation3], 1280
    $region13: #{tpu_custom_call.1} parent=1 // pred_fallthru
      _
    // Predicated region
    $region14: #{tpu_custom_call.1} parent=1 // pred_check
      _
    $region15: #{tpu_custom_call.1} parent=1 // pred_check_branch
      %38 = sbr.rel (0) target = $region17
    $region16: #{tpu_custom_call.1} parent=1 // pred_region
      %39 = dma.done [#allocation6], 30720
    $region17: #{tpu_custom_call.1} parent=1 // pred_fallthru
      _
    %v41 = vld [vmem:[#allocation2] sm:$0xff]
    %v42 = vld [vmem:[#allocation2 + $0x8] sm:$0xff]
    %v43 = vld [vmem:[#allocation2 + $0x10] sm:$0xff]
    %v44 = vld [vmem:[#allocation2 + $0x18] sm:$0xff]
    %v45 = vld [vmem:[#allocation2 + $0x20] sm:$0xf]
    %v46 = vld [vmem:[#allocation2 + $0x28] sm:$0xf]
    %v47 = vpack.c.bf16 %v43, %v41
    %v48 = vpack.c.bf16 %v44, %v42
    %v49 = vpack.c.bf16 %v45, %v45
    %v50 = vpack.c.bf16 %v46, %v46
    %v51 = vld [vmem:[#allocation5] sm:$0xf]
    %v52 = vld [vmem:[#allocation5 + $0xc] sm:$0xf]
    %v53 = vld [vmem:[#allocation5 + $0x18] sm:$0xf]
    %v54 = vld [vmem:[#allocation5 + $0x24] sm:$0xf]
    %v55 = vld [vmem:[#allocation5 + $0x30] sm:$0xf]
    %v56 = vld [vmem:[#allocation5 + $0x3c] sm:$0xf]
    %v57 = vld [vmem:[#allocation5 + $0x48] sm:$0xf]
    %v58 = vld [vmem:[#allocation5 + $0x54] sm:$0xf]
    %v59 = vld [vmem:[#allocation5 + $0x60] sm:$0xf]
    %v60 = vld [vmem:[#allocation5 + $0x6c] sm:$0xf]
    %v61 = vld [vmem:[#allocation5 + $0x78] sm:$0xf]
    %v62 = vld [vmem:[#allocation5 + $0x84] sm:$0xf]
    %v63 = vld [vmem:[#allocation5 + $0x90] sm:$0xf]
    %v64 = vld [vmem:[#allocation5 + $0x9c] sm:$0xf]
    %v65 = vld [vmem:[#allocation5 + $0xa8] sm:$0xf]
    %v66 = vld [vmem:[#allocation5 + $0xb4] sm:$0xf]
    %v67 = vld [vmem:[#allocation5 + $0xc0] sm:$0xf]
    %v68 = vld [vmem:[#allocation5 + $0xcc] sm:$0xf]
    %v69 = vld [vmem:[#allocation5 + $0xd8] sm:$0xf]
    %v70 = vld [vmem:[#allocation5 + $0xe4] sm:$0xf]
    %v71 = vld [vmem:[#allocation5 + $0xf0] sm:$0xf]
    %v72 = vld [vmem:[#allocation5 + $0xfc] sm:$0xf]
    %v73 = vld [vmem:[#allocation5 + $0x108] sm:$0xf]
    %v74 = vld [vmem:[#allocation5 + $0x114] sm:$0xf]
    %v75 = vld [vmem:[#allocation5 + $0x120] sm:$0x1]
    %v76 = vunpack.c.l.bf16 %v75
    %v77 = vlaneseq
    %v78 = vshrl.u32 %v77, 7
    %v79 = vsub.s32 0, %v78
    %v80 = vrot.slane %v76, %v79
    %v105 = vunpack.c.l.b16 %v51
    %v106 = vunpack.c.l.b16 %v52
    %v107 = vunpack.c.l.b16 %v53
    %v108 = vunpack.c.l.b16 %v54
    %v109 = vunpack.c.l.b16 %v55
    %v110 = vunpack.c.l.b16 %v56
    %v111 = vunpack.c.l.b16 %v57
    %v112 = vunpack.c.l.b16 %v58
    %v113 = vunpack.c.l.b16 %v59
    %v114 = vunpack.c.l.b16 %v60
    %v115 = vunpack.c.l.b16 %v61
    %v116 = vunpack.c.l.b16 %v62
    %v117 = vunpack.c.l.b16 %v63
    %v118 = vunpack.c.l.b16 %v64
    %v119 = vunpack.c.l.b16 %v65
    %v120 = vunpack.c.l.b16 %v66
    %v121 = vunpack.c.l.b16 %v67
    %v122 = vunpack.c.l.b16 %v68
    %v123 = vunpack.c.l.b16 %v69
    %v124 = vunpack.c.l.b16 %v70
    %v125 = vunpack.c.l.b16 %v71
    %v126 = vunpack.c.l.b16 %v72
    %v127 = vunpack.c.l.b16 %v73
    %v128 = vunpack.c.l.b16 %v74
    %v129 = vpack.c.b16 %v106, %v105
    %v130 = vpack.c.b16 %v108, %v107
    %v131 = vpack.c.b16 %v110, %v109
    %v132 = vpack.c.b16 %v112, %v111
    %v133 = vpack.c.b16 %v114, %v113
    %v134 = vpack.c.b16 %v116, %v115
    %v135 = vpack.c.b16 %v118, %v117
    %v136 = vpack.c.b16 %v120, %v119
    %v137 = vpack.c.b16 %v122, %v121
    %v138 = vpack.c.b16 %v124, %v123
    %v139 = vpack.c.b16 %v126, %v125
    %v140 = vpack.c.b16 %v128, %v127
    %vm153 = vcmask 523264
    %v155 = vsel %vm153, %v48, 0
    %v158 = vsel %vm153, %v50, 0
    %160 = vmatprep.subr.bf16.mxu0 0
    %161 = vmatpush1.bf16.msra.mxu0 %v129
    %162 = vmatprep.subr.bf16.mxu0 0
    %163 = vmatpush1.bf16.msra.mxu0 %v130
    %164 = vmatprep.subr.bf16.mxu0 0
    %165 = vmatpush1.bf16.msra.mxu0 %v131
    %166 = vmatprep.subr.bf16.mxu0 0
    %167 = vmatpush1.bf16.msra.mxu0 %v132
    %168 = vmatprep.subr.bf16.mxu0 0
    %169 = vmatpush1.bf16.msra.mxu0 %v133
    %170 = vmatprep.subr.bf16.mxu0 0
    %171 = vmatpush1.bf16.msra.mxu0 %v134
    %172 = vmatprep.subr.bf16.mxu0 0
    %173 = vmatpush1.bf16.msra.mxu0 %v135
    %174 = vmatprep.subr.bf16.mxu0 0
    %175 = vmatpush1.bf16.msra.mxu0 %v136
    %176 = vmatprep.subr.bf16.mxu0 0
    %177 = vmatpush1.bf16.msra.mxu0 %v137
    %178 = vmatprep.subr.bf16.mxu0 0
    %179 = vmatpush1.bf16.msra.mxu0 %v138
    %180 = vmatprep.subr.bf16.mxu0 0
    %181 = vmatpush1.bf16.msra.mxu0 %v139
    %182 = vmatprep.subr.bf16.mxu0 0
    %183 = vmatpush1.bf16.msra.mxu0 %v140
    %184 = vmatprep.subr.bf16.mxu0 0
    %185 = vmatpush1.bf16.msra.mxu0 0
    %186 = vmatprep.subr.bf16.mxu0 0
    %187 = vmatpush1.bf16.msra.mxu0 0
    %188 = vmatprep.subr.bf16.mxu0 0
    %189 = vmatpush1.bf16.msra.mxu0 0
    %190 = vmatprep.subr.bf16.mxu0 0
    %191 = vmatpush1.bf16.msra.mxu0 0
    %192 = vmatprep.mubr.bf16.mxu0 %v155
    %193 = vmatmul.mubr.bf16.gmra.mrb[0].mxu0 %v47
    %v194 = vpop.f32.mrb[0].mxu0
    %v195 = vadd.f32 %v80, %v194
    %v196 = vpop.f32.mrb[0].mxu0
    %v197 = vpop.f32.mrb[0].mxu0
    %v198 = vadd.f32 %v80, %v197
    %v199 = vpop.f32.mrb[0].mxu0
    %200 = vmatprep.mubr.bf16.mxu0 %v158
    %201 = vmatmul.mubr.bf16.gmra.mrb[0].mxu0 %v49
    %v202 = vpop.f32.mrb[0].mxu0
    %v203 = vadd.f32 %v80, %v202
    %v204 = vpop.f32.mrb[0].mxu0
    %v205 = vpop.f32.mrb[0].mxu0
    %v206 = vpop.f32.mrb[0].mxu0
    %207 = vdwg.mxu0
    %vm208 = vcmp.gt.f32.partialorder %v195, 0.0
    %vm209 = vcmp.gt.f32.partialorder %v198, 0.0
    %vm210 = vcmp.gt.f32.partialorder %v203, 0.0
    %v211 = vmul.f32 %v195, 0.01
    %v212 = vmul.f32 %v198, 0.01
    %v213 = vmul.f32 %v203, 0.01
    %v214 = vsel %vm208, %v195, %v211
    %v215 = vsel %vm209, %v198, %v212
    %v216 = vsel %vm210, %v203, %v213
    %v217 = vpack.c.bf16 %v215, %v214
    %v218 = vpack.c.bf16 %v216, %v216
    %v219 = vld [vmem:[#allocation5 + $0x138] sm:$0xf]
    %v220 = vld [vmem:[#allocation5 + $0x144] sm:$0xf]
    %v221 = vld [vmem:[#allocation5 + $0x150] sm:$0xf]
    %v222 = vld [vmem:[#allocation5 + $0x15c] sm:$0xf]
    %v223 = vld [vmem:[#allocation5 + $0x168] sm:$0xf]
    %v224 = vld [vmem:[#allocation5 + $0x174] sm:$0xf]
    %v225 = vld [vmem:[#allocation5 + $0x180] sm:$0xf]
    %v226 = vld [vmem:[#allocation5 + $0x18c] sm:$0xf]
    %v227 = vld [vmem:[#allocation5 + $0x198] sm:$0xf]
    %v228 = vld [vmem:[#allocation5 + $0x1a4] sm:$0xf]
    %v229 = vld [vmem:[#allocation5 + $0x1b0] sm:$0xf]
    %v230 = vld [vmem:[#allocation5 + $0x1bc] sm:$0xf]
    %v231 = vld [vmem:[#allocation5 + $0x1c8] sm:$0xf]
    %v232 = vld [vmem:[#allocation5 + $0x1d4] sm:$0xf]
    %v233 = vld [vmem:[#allocation5 + $0x1e0] sm:$0xf]
    %v234 = vld [vmem:[#allocation5 + $0x1ec] sm:$0xf]
    %v235 = vld [vmem:[#allocation5 + $0x1f8] sm:$0xf]
    %v236 = vld [vmem:[#allocation5 + $0x204] sm:$0xf]
    %v237 = vld [vmem:[#allocation5 + $0x210] sm:$0xf]
    %v238 = vld [vmem:[#allocation5 + $0x21c] sm:$0xf]
    %v239 = vld [vmem:[#allocation5 + $0x228] sm:$0xf]
    %v240 = vld [vmem:[#allocation5 + $0x234] sm:$0xf]
    %v241 = vld [vmem:[#allocation5 + $0x240] sm:$0xf]
    %v242 = vld [vmem:[#allocation5 + $0x24c] sm:$0xf]
    %v243 = vld [vmem:[#allocation5 + $0x258] sm:$0xf]
    %v244 = vld [vmem:[#allocation5 + $0x264] sm:$0xf]
    %v245 = vld [vmem:[#allocation5 + $0x270] sm:$0xf]
    %v246 = vld [vmem:[#allocation5 + $0x27c] sm:$0xf]
    %vm249 = vcmask 1046528
    %v250 = vrot.slane %v217, 1
    %v251 = vrot.slane %v218, 1
    %v252 = vsel %vm249, %v250, %v251
    %v267 = vunpack.c.l.b16 %v233
    %v268 = vunpack.c.l.b16 %v234
    %v269 = vunpack.c.l.b16 %v235
    %v270 = vunpack.c.l.b16 %v236
    %v271 = vunpack.c.l.b16 %v237
    %v272 = vunpack.c.l.b16 %v238
    %v273 = vunpack.c.l.b16 %v239
    %v274 = vunpack.c.l.b16 %v240
    %v275 = vunpack.c.l.b16 %v241
    %v276 = vunpack.c.l.b16 %v242
    %v277 = vunpack.c.l.b16 %v243
    %v278 = vunpack.c.l.b16 %v244
    %v279 = vunpack.c.l.b16 %v245
    %v280 = vunpack.c.l.b16 %v246
    %v281 = vpack.c.b16 %v268, %v267
    %v282 = vpack.c.b16 %v270, %v269
    %v283 = vpack.c.b16 %v272, %v271
    %v284 = vpack.c.b16 %v274, %v273
    %v285 = vpack.c.b16 %v276, %v275
    %v286 = vpack.c.b16 %v278, %v277
    %v287 = vpack.c.b16 %v280, %v279
    %vm295 = vcmask 916480
    %v297 = vsel %vm295, %v252, 0
    %299 = vmatprep.subr.bf16.mxu0 0
    %300 = vmatpush1.bf16.msra.mxu0 %v281
    %301 = vmatprep.subr.bf16.mxu0 0
    %302 = vmatpush1.bf16.msra.mxu0 %v282
    %303 = vmatprep.subr.bf16.mxu0 0
    %304 = vmatpush1.bf16.msra.mxu0 %v283
    %305 = vmatprep.subr.bf16.mxu0 0
    %306 = vmatpush1.bf16.msra.mxu0 %v284
    %307 = vmatprep.subr.bf16.mxu0 0
    %308 = vmatpush1.bf16.msra.mxu0 %v285
    %309 = vmatprep.subr.bf16.mxu0 0
    %310 = vmatpush1.bf16.msra.mxu0 %v286
    %311 = vmatprep.subr.bf16.mxu0 0
    %312 = vmatpush1.bf16.msra.mxu0 %v287
    %313 = vmatprep.subr.bf16.mxu0 0
    %314 = vmatpush1.bf16.msra.mxu0 0
    %315 = vmatprep.subr.bf16.mxu0 0
    %316 = vmatpush1.bf16.msra.mxu0 0
    %317 = vmatprep.subr.bf16.mxu0 0
    %318 = vmatpush1.bf16.msra.mxu0 0
    %319 = vmatprep.subr.bf16.mxu0 0
    %320 = vmatpush1.bf16.msra.mxu0 0
    %321 = vmatprep.subr.bf16.mxu0 0
    %322 = vmatpush1.bf16.msra.mxu0 0
    %323 = vmatprep.subr.bf16.mxu0 0
    %324 = vmatpush1.bf16.msra.mxu0 0
    %325 = vmatprep.subr.bf16.mxu0 0
    %326 = vmatpush1.bf16.msra.mxu0 0
    %327 = vmatprep.subr.bf16.mxu0 0
    %328 = vmatpush1.bf16.msra.mxu0 0
    %329 = vmatprep.subr.bf16.mxu0 0
    %330 = vmatpush1.bf16.msra.mxu0 0
    %331 = vmatprep.mubr.bf16.mxu0 0
    %332 = vmatmul.mubr.bf16.gmra.mrb[0].mxu0 %v297
    %v333 = vpop.f32.mrb[0].mxu0
    %v334 = vadd.f32 0.0, %v333
    %v335 = vpop.f32.mrb[0].mxu0
    %v336 = vpop.f32.mrb[0].mxu0
    %v337 = vadd.f32 0.0, %v336
    %v338 = vpop.f32.mrb[0].mxu0
    %339 = vdwg.mxu0
    %v354 = vunpack.c.l.b16 %v219
    %v355 = vunpack.c.l.b16 %v220
    %v356 = vunpack.c.l.b16 %v221
    %v357 = vunpack.c.l.b16 %v222
    %v358 = vunpack.c.l.b16 %v223
    %v359 = vunpack.c.l.b16 %v224
    %v360 = vunpack.c.l.b16 %v225
    %v361 = vunpack.c.l.b16 %v226
    %v362 = vunpack.c.l.b16 %v227
    %v363 = vunpack.c.l.b16 %v228
    %v364 = vunpack.c.l.b16 %v229
    %v365 = vunpack.c.l.b16 %v230
    %v366 = vunpack.c.l.b16 %v231
    %v367 = vunpack.c.l.b16 %v232
    %v368 = vpack.c.b16 %v355, %v354
    %v369 = vpack.c.b16 %v357, %v356
    %v370 = vpack.c.b16 %v359, %v358
    %v371 = vpack.c.b16 %v361, %v360
    %v372 = vpack.c.b16 %v363, %v362
    %v373 = vpack.c.b16 %v365, %v364
    %v374 = vpack.c.b16 %v367, %v366
    %v383 = vsel %vm295, %v217, 0
    %385 = vmatprep.subr.bf16.mxu0 0
    %386 = vmatpush1.bf16.msra.mxu0 %v368
    %387 = vmatprep.subr.bf16.mxu0 0
    %388 = vmatpush1.bf16.msra.mxu0 %v369
    %389 = vmatprep.subr.bf16.mxu0 0
    %390 = vmatpush1.bf16.msra.mxu0 %v370
    %391 = vmatprep.subr.bf16.mxu0 0
    %392 = vmatpush1.bf16.msra.mxu0 %v371
    %393 = vmatprep.subr.bf16.mxu0 0
    %394 = vmatpush1.bf16.msra.mxu0 %v372
    %395 = vmatprep.subr.bf16.mxu0 0
    %396 = vmatpush1.bf16.msra.mxu0 %v373
    %397 = vmatprep.subr.bf16.mxu0 0
    %398 = vmatpush1.bf16.msra.mxu0 %v374
    %399 = vmatprep.subr.bf16.mxu0 0
    %400 = vmatpush1.bf16.msra.mxu0 0
    %401 = vmatprep.subr.bf16.mxu0 0
    %402 = vmatpush1.bf16.msra.mxu0 0
    %403 = vmatprep.subr.bf16.mxu0 0
    %404 = vmatpush1.bf16.msra.mxu0 0
    %405 = vmatprep.subr.bf16.mxu0 0
    %406 = vmatpush1.bf16.msra.mxu0 0
    %407 = vmatprep.subr.bf16.mxu0 0
    %408 = vmatpush1.bf16.msra.mxu0 0
    %409 = vmatprep.subr.bf16.mxu0 0
    %410 = vmatpush1.bf16.msra.mxu0 0
    %411 = vmatprep.subr.bf16.mxu0 0
    %412 = vmatpush1.bf16.msra.mxu0 0
    %413 = vmatprep.subr.bf16.mxu0 0
    %414 = vmatpush1.bf16.msra.mxu0 0
    %415 = vmatprep.subr.bf16.mxu0 0
    %416 = vmatpush1.bf16.msra.mxu0 0
    %417 = vmatprep.mubr.bf16.mxu0 0
    %418 = vmatmul.mubr.bf16.gmra.mrb[0].mxu0 %v383
    %v419 = vpop.f32.mrb[0].mxu0
    %v420 = vadd.f32 %v334, %v419
    %v421 = vpop.f32.mrb[0].mxu0
    %v422 = vpop.f32.mrb[0].mxu0
    %v423 = vadd.f32 %v337, %v422
    %v424 = vpop.f32.mrb[0].mxu0
    %425 = vdwg.mxu0
    %v426 = vld [vmem:[#allocation5 + $0x288] sm:$0xf]
    %v427 = vld [vmem:[#allocation5 + $0x294] sm:$0xf]
    %v428 = vld [vmem:[#allocation5 + $0x2a0] sm:$0xf]
    %v429 = vld [vmem:[#allocation5 + $0x2ac] sm:$0xf]
    %v430 = vld [vmem:[#allocation5 + $0x2b8] sm:$0xf]
    %v431 = vld [vmem:[#allocation5 + $0x2c4] sm:$0xf]
    %v432 = vld [vmem:[#allocation5 + $0x2d0] sm:$0xf]
    %v433 = vld [vmem:[#allocation5 + $0x2dc] sm:$0xf]
    %v434 = vld [vmem:[#allocation5 + $0x2e8] sm:$0xf]
    %v435 = vld [vmem:[#allocation5 + $0x2f4] sm:$0xf]
    %v436 = vld [vmem:[#allocation5 + $0x300] sm:$0xf]
    %v437 = vld [vmem:[#allocation5 + $0x30c] sm:$0xf]
    %v438 = vld [vmem:[#allocation5 + $0x318] sm:$0xf]
    %v439 = vld [vmem:[#allocation5 + $0x324] sm:$0xf]
    %vm440 = vcmask 1045504
    %v441 = vrot.slane %v217, 2
    %v442 = vrot.slane %v218, 2
    %v443 = vsel %vm440, %v441, %v442
    %v458 = vunpack.c.l.b16 %v426
    %v459 = vunpack.c.l.b16 %v427
    %v460 = vunpack.c.l.b16 %v428
    %v461 = vunpack.c.l.b16 %v429
    %v462 = vunpack.c.l.b16 %v430
    %v463 = vunpack.c.l.b16 %v431
    %v464 = vunpack.c.l.b16 %v432
    %v465 = vunpack.c.l.b16 %v433
    %v466 = vunpack.c.l.b16 %v434
    %v467 = vunpack.c.l.b16 %v435
    %v468 = vunpack.c.l.b16 %v436
    %v469 = vunpack.c.l.b16 %v437
    %v470 = vunpack.c.l.b16 %v438
    %v471 = vunpack.c.l.b16 %v439
    %v472 = vpack.c.b16 %v459, %v458
    %v473 = vpack.c.b16 %v461, %v460
    %v474 = vpack.c.b16 %v463, %v462
    %v475 = vpack.c.b16 %v465, %v464
    %v476 = vpack.c.b16 %v467, %v466
    %v477 = vpack.c.b16 %v469, %v468
    %v478 = vpack.c.b16 %v471, %v470
    %v487 = vsel %vm295, %v443, 0
    %489 = vmatprep.subr.bf16.mxu0 0
    %490 = vmatpush1.bf16.msra.mxu0 %v472
    %491 = vmatprep.subr.bf16.mxu0 0
    %492 = vmatpush1.bf16.msra.mxu0 %v473
    %493 = vmatprep.subr.bf16.mxu0 0
    %494 = vmatpush1.bf16.msra.mxu0 %v474
    %495 = vmatprep.subr.bf16.mxu0 0
    %496 = vmatpush1.bf16.msra.mxu0 %v475
    %497 = vmatprep.subr.bf16.mxu0 0
    %498 = vmatpush1.bf16.msra.mxu0 %v476
    %499 = vmatprep.subr.bf16.mxu0 0
    %500 = vmatpush1.bf16.msra.mxu0 %v477
    %501 = vmatprep.subr.bf16.mxu0 0
    %502 = vmatpush1.bf16.msra.mxu0 %v478
    %503 = vmatprep.subr.bf16.mxu0 0
    %504 = vmatpush1.bf16.msra.mxu0 0
    %505 = vmatprep.subr.bf16.mxu0 0
    %506 = vmatpush1.bf16.msra.mxu0 0
    %507 = vmatprep.subr.bf16.mxu0 0
    %508 = vmatpush1.bf16.msra.mxu0 0
    %509 = vmatprep.subr.bf16.mxu0 0
    %510 = vmatpush1.bf16.msra.mxu0 0
    %511 = vmatprep.subr.bf16.mxu0 0
    %512 = vmatpush1.bf16.msra.mxu0 0
    %513 = vmatprep.subr.bf16.mxu0 0
    %514 = vmatpush1.bf16.msra.mxu0 0
    %515 = vmatprep.subr.bf16.mxu0 0
    %516 = vmatpush1.bf16.msra.mxu0 0
    %517 = vmatprep.subr.bf16.mxu0 0
    %518 = vmatpush1.bf16.msra.mxu0 0
    %519 = vmatprep.subr.bf16.mxu0 0
    %520 = vmatpush1.bf16.msra.mxu0 0
    %521 = vmatprep.mubr.bf16.mxu0 0
    %522 = vmatmul.mubr.bf16.gmra.mrb[0].mxu0 %v487
    %v523 = vpop.f32.mrb[0].mxu0
    %v524 = vadd.f32 0.0, %v523
    %v525 = vpop.f32.mrb[0].mxu0
    %v526 = vpop.f32.mrb[0].mxu0
    %v527 = vadd.f32 0.0, %v526
    %v528 = vpop.f32.mrb[0].mxu0
    %529 = vdwg.mxu0
    %v530 = vadd.f32 %v420, %v524
    %v531 = vadd.f32 %v423, %v527
    %v532 = vld [vmem:[#allocation5 + $0x330] sm:$0x1]
    %v533 = vunpack.c.l.bf16 %v532
    %v534 = vlaneseq
    %v535 = vshrl.u32 %v534, 7
    %v536 = vsub.s32 0, %v535
    %v537 = vrot.slane %v533, %v536
    %v538 = vadd.f32 %v530, %v537
    %v539 = vadd.f32 %v531, %v537
    %vm540 = vcmp.gt.f32.partialorder %v538, 0.0
    %vm541 = vcmp.gt.f32.partialorder %v539, 0.0
    %v542 = vmul.f32 %v538, 0.01
    %v543 = vmul.f32 %v539, 0.01
    %v544 = vsel %vm540, %v538, %v542
    %v545 = vsel %vm541, %v539, %v543
    %v546 = vpack.c.bf16 %v545, %v544
    %v547 = vld [vmem:[#allocation5 + $0x348] sm:$0xff]
    %v548 = vld [vmem:[#allocation5 + $0x350] sm:$0xf]
    %v549 = vld [vmem:[#allocation5 + $0x354] sm:$0x33]
    %v550 = vld [vmem:[#allocation5 + $0x35c] sm:$0x3]
    %v551 = vld [vmem:[#allocation5 + $0x360] sm:$0x11]
    %v552 = vld [vmem:[#allocation5 + $0x368] sm:$0x1]
    %v553 = vunpack.c.l.bf16 %v551
    %v554 = vunpack.c.h.bf16 %v551
    %v555 = vunpack.c.l.bf16 %v552
    %v556 = vlaneseq
    %v557 = vshrl.u32 %v556, 7
    %v558 = vsub.s32 0, %v557
    %v559 = vrot.slane %v553, %v558
    %v560 = vlaneseq
    %v561 = vshrl.u32 %v560, 7
    %v562 = vsub.s32 0, %v561
    %v563 = vrot.slane %v554, %v562
    %v564 = vlaneseq
    %v565 = vshrl.u32 %v564, 7
    %v566 = vsub.s32 0, %v565
    %v567 = vrot.slane %v555, %v566
    %v572 = vunpack.c.l.b16 %v547
    %v573 = vunpack.c.h.b16 %v547
    %v574 = vunpack.c.l.b16 %v548
    %v575 = vunpack.c.l.b16 %v549
    %v576 = vunpack.c.h.b16 %v549
    %v577 = vunpack.c.l.b16 %v550
    %v578 = vpack.c.b16 %v575, %v572
    %v579 = vpack.c.b16 %v576, %v573
    %v580 = vpack.c.b16 %v577, %v574
    %vm581 = vcmask 97280
    %v583 = vsel %vm581, %v546, 0
    %vm585 = vcmask 1045504
    %v587 = vsel %vm585, %v578, 0
    %v590 = vsel %vm585, %v579, 0
    %v593 = vsel %vm585, %v580, 0
    %595 = vmatprep.subr.bf16.mxu0 %v590
    %596 = vmatpush1.bf16.msra.mxu0 %v587
    %597 = vmatprep.subr.bf16.mxu0 0
    %598 = vmatpush1.bf16.msra.mxu0 0
    %599 = vmatprep.subr.bf16.mxu0 0
    %600 = vmatpush1.bf16.msra.mxu0 0
    %601 = vmatprep.subr.bf16.mxu0 0
    %602 = vmatpush1.bf16.msra.mxu0 0
    %603 = vmatprep.subr.bf16.mxu0 0
    %604 = vmatpush1.bf16.msra.mxu0 0
    %605 = vmatprep.subr.bf16.mxu0 0
    %606 = vmatpush1.bf16.msra.mxu0 0
    %607 = vmatprep.subr.bf16.mxu0 0
    %608 = vmatpush1.bf16.msra.mxu0 0
    %609 = vmatprep.subr.bf16.mxu0 0
    %610 = vmatpush1.bf16.msra.mxu0 0
    %611 = vmatprep.subr.bf16.mxu0 0
    %612 = vmatpush1.bf16.msra.mxu0 0
    %613 = vmatprep.subr.bf16.mxu0 0
    %614 = vmatpush1.bf16.msra.mxu0 0
    %615 = vmatprep.subr.bf16.mxu0 0
    %616 = vmatpush1.bf16.msra.mxu0 0
    %617 = vmatprep.subr.bf16.mxu0 0
    %618 = vmatpush1.bf16.msra.mxu0 0
    %619 = vmatprep.subr.bf16.mxu0 0
    %620 = vmatpush1.bf16.msra.mxu0 0
    %621 = vmatprep.subr.bf16.mxu0 0
    %622 = vmatpush1.bf16.msra.mxu0 0
    %623 = vmatprep.subr.bf16.mxu0 0
    %624 = vmatpush1.bf16.msra.mxu0 0
    %625 = vmatprep.subr.bf16.mxu0 0
    %626 = vmatpush1.bf16.msra.mxu0 0
    %627 = vmatprep.mubr.bf16.mxu0 0
    %628 = vmatmul.mubr.bf16.gmra.mrb[0].mxu0 %v583
    %v629 = vpop.f32.mrb[0].mxu0
    %v630 = vadd.f32 %v559, %v629
    %v631 = vpop.f32.mrb[0].mxu0
    %v632 = vadd.f32 %v563, %v631
    %v633 = vpop.f32.mrb[0].mxu0
    %v634 = vadd.f32 %v559, %v633
    %v635 = vpop.f32.mrb[0].mxu0
    %v636 = vadd.f32 %v563, %v635
    %637 = vdwg.mxu0
    %638 = vmatprep.subr.bf16.mxu0 0
    %639 = vmatpush1.bf16.msra.mxu0 %v593
    %640 = vmatprep.subr.bf16.mxu0 0
    %641 = vmatpush1.bf16.msra.mxu0 0
    %642 = vmatprep.subr.bf16.mxu0 0
    %643 = vmatpush1.bf16.msra.mxu0 0
    %644 = vmatprep.subr.bf16.mxu0 0
    %645 = vmatpush1.bf16.msra.mxu0 0
    %646 = vmatprep.subr.bf16.mxu0 0
    %647 = vmatpush1.bf16.msra.mxu0 0
    %648 = vmatprep.subr.bf16.mxu0 0
    %649 = vmatpush1.bf16.msra.mxu0 0
    %650 = vmatprep.subr.bf16.mxu0 0
    %651 = vmatpush1.bf16.msra.mxu0 0
    %652 = vmatprep.subr.bf16.mxu0 0
    %653 = vmatpush1.bf16.msra.mxu0 0
    %654 = vmatprep.subr.bf16.mxu0 0
    %655 = vmatpush1.bf16.msra.mxu0 0
    %656 = vmatprep.subr.bf16.mxu0 0
    %657 = vmatpush1.bf16.msra.mxu0 0
    %658 = vmatprep.subr.bf16.mxu0 0
    %659 = vmatpush1.bf16.msra.mxu0 0
    %660 = vmatprep.subr.bf16.mxu0 0
    %661 = vmatpush1.bf16.msra.mxu0 0
    %662 = vmatprep.subr.bf16.mxu0 0
    %663 = vmatpush1.bf16.msra.mxu0 0
    %664 = vmatprep.subr.bf16.mxu0 0
    %665 = vmatpush1.bf16.msra.mxu0 0
    %666 = vmatprep.subr.bf16.mxu0 0
    %667 = vmatpush1.bf16.msra.mxu0 0
    %668 = vmatprep.subr.bf16.mxu0 0
    %669 = vmatpush1.bf16.msra.mxu0 0
    %670 = vmatprep.mubr.bf16.mxu0 0
    %671 = vmatmul.mubr.bf16.gmra.mrb[0].mxu0 %v583
    %v672 = vpop.f32.mrb[0].mxu0
    %v673 = vadd.f32 %v567, %v672
    %v674 = vpop.f32.mrb[0].mxu0
    %v675 = vpop.f32.mrb[0].mxu0
    %v676 = vadd.f32 %v567, %v675
    %v677 = vpop.f32.mrb[0].mxu0
    %678 = vdwg.mxu0
    %v679 = vld [vmem:[#allocation5 + $0x378] sm:$0xff]
    %v680 = vld [vmem:[#allocation5 + $0x380] sm:$0xf]
    %v681 = vld [vmem:[#allocation5 + $0x384] sm:$0xff]
    %v682 = vld [vmem:[#allocation5 + $0x38c] sm:$0xf]
    %v683 = vld [vmem:[#allocation5 + $0x390] sm:$0xff]
    %v684 = vld [vmem:[#allocation5 + $0x398] sm:$0xf]
    %v685 = vld [vmem:[#allocation5 + $0x39c] sm:$0xff]
    %v686 = vld [vmem:[#allocation5 + $0x3a4] sm:$0xf]
    %v687 = vld [vmem:[#allocation5 + $0x3a8] sm:$0xff]
    %v688 = vld [vmem:[#allocation5 + $0x3b0] sm:$0xf]
    %v689 = vld [vmem:[#allocation5 + $0x3b4] sm:$0xff]
    %v690 = vld [vmem:[#allocation5 + $0x3bc] sm:$0xf]
    %v691 = vld [vmem:[#allocation5 + $0x3c0] sm:$0xff]
    %v692 = vld [vmem:[#allocation5 + $0x3c8] sm:$0xf]
    %v693 = vld [vmem:[#allocation5 + $0x3cc] sm:$0xff]
    %v694 = vld [vmem:[#allocation5 + $0x3d4] sm:$0xf]
    %v695 = vld [vmem:[#allocation5 + $0x3d8] sm:$0xff]
    %v696 = vld [vmem:[#allocation5 + $0x3e0] sm:$0xf]
    %v697 = vld [vmem:[#allocation5 + $0x3e4] sm:$0xff]
    %v698 = vld [vmem:[#allocation5 + $0x3ec] sm:$0xf]
    %v699 = vld [vmem:[#allocation5 + $0x3f0] sm:$0xff]
    %v700 = vld [vmem:[#allocation5 + $0x3f8] sm:$0xf]
    %v701 = vld [vmem:[#allocation5 + $0x3fc] sm:$0xff]
    %v702 = vld [vmem:[#allocation5 + $0x404] sm:$0xf]
    %v703 = vld [vmem:[#allocation5 + $0x408] sm:$0xff]
    %v704 = vld [vmem:[#allocation5 + $0x410] sm:$0xf]
    %v705 = vld [vmem:[#allocation5 + $0x414] sm:$0xff]
    %v706 = vld [vmem:[#allocation5 + $0x41c] sm:$0xf]
    %v707 = vld [vmem:[#allocation5 + $0x420] sm:$0xff]
    %v708 = vld [vmem:[#allocation5 + $0x428] sm:$0xf]
    %v709 = vld [vmem:[#allocation5 + $0x42c] sm:$0xff]
    %v710 = vld [vmem:[#allocation5 + $0x434] sm:$0xf]
    %v711 = vld [vmem:[#allocation5 + $0x438] sm:$0x11]
    %v712 = vld [vmem:[#allocation5 + $0x440] sm:$0x1]
    %v713 = vunpack.c.l.bf16 %v711
    %v714 = vunpack.c.h.bf16 %v711
    %v715 = vunpack.c.l.bf16 %v712
    %v716 = vlaneseq
    %v717 = vshrl.u32 %v716, 7
    %v718 = vsub.s32 0, %v717
    %v719 = vrot.slane %v713, %v718
    %v720 = vlaneseq
    %v721 = vshrl.u32 %v720, 7
    %v722 = vsub.s32 0, %v721
    %v723 = vrot.slane %v714, %v722
    %v724 = vlaneseq
    %v725 = vshrl.u32 %v724, 7
    %v726 = vsub.s32 0, %v725
    %v727 = vrot.slane %v715, %v726
    %v760 = vunpack.c.l.b16 %v679
    %v761 = vunpack.c.h.b16 %v679
    %v762 = vunpack.c.l.b16 %v680
    %v763 = vunpack.c.l.b16 %v681
    %v764 = vunpack.c.h.b16 %v681
    %v765 = vunpack.c.l.b16 %v682
    %v766 = vunpack.c.l.b16 %v683
    %v767 = vunpack.c.h.b16 %v683
    %v768 = vunpack.c.l.b16 %v684
    %v769 = vunpack.c.l.b16 %v685
    %v770 = vunpack.c.h.b16 %v685
    %v771 = vunpack.c.l.b16 %v686
    %v772 = vunpack.c.l.b16 %v687
    %v773 = vunpack.c.h.b16 %v687
    %v774 = vunpack.c.l.b16 %v688
    %v775 = vunpack.c.l.b16 %v689
    %v776 = vunpack.c.h.b16 %v689
    %v777 = vunpack.c.l.b16 %v690
    %v778 = vunpack.c.l.b16 %v691
    %v779 = vunpack.c.h.b16 %v691
    %v780 = vunpack.c.l.b16 %v692
    %v781 = vunpack.c.l.b16 %v693
    %v782 = vunpack.c.h.b16 %v693
    %v783 = vunpack.c.l.b16 %v694
    %v784 = vunpack.c.l.b16 %v695
    %v785 = vunpack.c.h.b16 %v695
    %v786 = vunpack.c.l.b16 %v696
    %v787 = vunpack.c.l.b16 %v697
    %v788 = vunpack.c.h.b16 %v697
    %v789 = vunpack.c.l.b16 %v698
    %v790 = vunpack.c.l.b16 %v699
    %v791 = vunpack.c.h.b16 %v699
    %v792 = vunpack.c.l.b16 %v700
    %v793 = vunpack.c.l.b16 %v701
    %v794 = vunpack.c.h.b16 %v701
    %v795 = vunpack.c.l.b16 %v702
    %v796 = vunpack.c.l.b16 %v703
    %v797 = vunpack.c.h.b16 %v703
    %v798 = vunpack.c.l.b16 %v704
    %v799 = vunpack.c.l.b16 %v705
    %v800 = vunpack.c.h.b16 %v705
    %v801 = vunpack.c.l.b16 %v706
    %v802 = vunpack.c.l.b16 %v707
    %v803 = vunpack.c.h.b16 %v707
    %v804 = vunpack.c.l.b16 %v708
    %v805 = vunpack.c.l.b16 %v709
    %v806 = vunpack.c.h.b16 %v709
    %v807 = vunpack.c.l.b16 %v710
    %v808 = vpack.c.b16 %v763, %v760
    %v809 = vpack.c.b16 %v764, %v761
    %v810 = vpack.c.b16 %v765, %v762
    %v811 = vpack.c.b16 %v769, %v766
    %v812 = vpack.c.b16 %v770, %v767
    %v813 = vpack.c.b16 %v771, %v768
    %v814 = vpack.c.b16 %v775, %v772
    %v815 = vpack.c.b16 %v776, %v773
    %v816 = vpack.c.b16 %v777, %v774
    %v817 = vpack.c.b16 %v781, %v778
    %v818 = vpack.c.b16 %v782, %v779
    %v819 = vpack.c.b16 %v783, %v780
    %v820 = vpack.c.b16 %v787, %v784
    %v821 = vpack.c.b16 %v788, %v785
    %v822 = vpack.c.b16 %v789, %v786
    %v823 = vpack.c.b16 %v793, %v790
    %v824 = vpack.c.b16 %v794, %v791
    %v825 = vpack.c.b16 %v795, %v792
    %v826 = vpack.c.b16 %v799, %v796
    %v827 = vpack.c.b16 %v800, %v797
    %v828 = vpack.c.b16 %v801, %v798
    %v829 = vpack.c.b16 %v805, %v802
    %v830 = vpack.c.b16 %v806, %v803
    %v831 = vpack.c.b16 %v807, %v804
    %856 = vmatprep.subr.bf16.mxu0 %v809
    %857 = vmatpush1.bf16.msra.mxu0 %v808
    %858 = vmatprep.subr.bf16.mxu0 %v812
    %859 = vmatpush1.bf16.msra.mxu0 %v811
    %860 = vmatprep.subr.bf16.mxu0 %v815
    %861 = vmatpush1.bf16.msra.mxu0 %v814
    %862 = vmatprep.subr.bf16.mxu0 %v818
    %863 = vmatpush1.bf16.msra.mxu0 %v817
    %864 = vmatprep.subr.bf16.mxu0 %v821
    %865 = vmatpush1.bf16.msra.mxu0 %v820
    %866 = vmatprep.subr.bf16.mxu0 %v824
    %867 = vmatpush1.bf16.msra.mxu0 %v823
    %868 = vmatprep.subr.bf16.mxu0 %v827
    %869 = vmatpush1.bf16.msra.mxu0 %v826
    %870 = vmatprep.subr.bf16.mxu0 %v830
    %871 = vmatpush1.bf16.msra.mxu0 %v829
    %872 = vmatprep.subr.bf16.mxu0 0
    %873 = vmatpush1.bf16.msra.mxu0 0
    %874 = vmatprep.subr.bf16.mxu0 0
    %875 = vmatpush1.bf16.msra.mxu0 0
    %876 = vmatprep.subr.bf16.mxu0 0
    %877 = vmatpush1.bf16.msra.mxu0 0
    %878 = vmatprep.subr.bf16.mxu0 0
    %879 = vmatpush1.bf16.msra.mxu0 0
    %880 = vmatprep.subr.bf16.mxu0 0
    %881 = vmatpush1.bf16.msra.mxu0 0
    %882 = vmatprep.subr.bf16.mxu0 0
    %883 = vmatpush1.bf16.msra.mxu0 0
    %884 = vmatprep.subr.bf16.mxu0 0
    %885 = vmatpush1.bf16.msra.mxu0 0
    %886 = vmatprep.subr.bf16.mxu0 0
    %887 = vmatpush1.bf16.msra.mxu0 0
    %888 = vmatprep.mubr.bf16.mxu0 0
    %889 = vmatmul.mubr.bf16.gmra.mrb[0].mxu0 0
    %v890 = vpop.f32.mrb[0].mxu0
    %v891 = vadd.f32 %v719, %v890
    %v892 = vpop.f32.mrb[0].mxu0
    %v893 = vadd.f32 %v723, %v892
    %v894 = vpop.f32.mrb[0].mxu0
    %v895 = vpop.f32.mrb[0].mxu0
    %896 = vdwg.mxu0
    %897 = vmatprep.subr.bf16.mxu0 0
    %898 = vmatpush1.bf16.msra.mxu0 %v810
    %899 = vmatprep.subr.bf16.mxu0 0
    %900 = vmatpush1.bf16.msra.mxu0 %v813
    %901 = vmatprep.subr.bf16.mxu0 0
    %902 = vmatpush1.bf16.msra.mxu0 %v816
    %903 = vmatprep.subr.bf16.mxu0 0
    %904 = vmatpush1.bf16.msra.mxu0 %v819
    %905 = vmatprep.subr.bf16.mxu0 0
    %906 = vmatpush1.bf16.msra.mxu0 %v822
    %907 = vmatprep.subr.bf16.mxu0 0
    %908 = vmatpush1.bf16.msra.mxu0 %v825
    %909 = vmatprep.subr.bf16.mxu0 0
    %910 = vmatpush1.bf16.msra.mxu0 %v828
    %911 = vmatprep.subr.bf16.mxu0 0
    %912 = vmatpush1.bf16.msra.mxu0 %v831
    %913 = vmatprep.subr.bf16.mxu0 0
    %914 = vmatpush1.bf16.msra.mxu0 0
    %915 = vmatprep.subr.bf16.mxu0 0
    %916 = vmatpush1.bf16.msra.mxu0 0
    %917 = vmatprep.subr.bf16.mxu0 0
    %918 = vmatpush1.bf16.msra.mxu0 0
    %919 = vmatprep.subr.bf16.mxu0 0
    %920 = vmatpush1.bf16.msra.mxu0 0
    %921 = vmatprep.subr.bf16.mxu0 0
    %922 = vmatpush1.bf16.msra.mxu0 0
    %923 = vmatprep.subr.bf16.mxu0 0
    %924 = vmatpush1.bf16.msra.mxu0 0
    %925 = vmatprep.subr.bf16.mxu0 0
    %926 = vmatpush1.bf16.msra.mxu0 0
    %927 = vmatprep.subr.bf16.mxu0 0
    %928 = vmatpush1.bf16.msra.mxu0 0
    %929 = vmatprep.mubr.bf16.mxu0 0
    %930 = vmatmul.mubr.bf16.gmra.mrb[0].mxu0 0
    %v931 = vpop.f32.mrb[0].mxu0
    %v932 = vadd.f32 %v727, %v931
    %v933 = vpop.f32.mrb[0].mxu0
    %v934 = vpop.f32.mrb[0].mxu0
    %v935 = vpop.f32.mrb[0].mxu0
    %936 = vdwg.mxu0
    %v937 = vadd.f32 %v630, %v891
    %v938 = vxor.u32 %v937, 2147483648
    %v939 = vmul.f32 %v938, 1.442695
    %v940 = vpow.pop %v939
    %v941 = vadd.f32 %v940, 1.0
    %v942 = vrcp.pop %v941
    %v943 = vmul.f32 1.0, %v942
    %v944 = vadd.f32 %v632, %v893
    %v945 = vxor.u32 %v944, 2147483648
    %v946 = vmul.f32 %v945, 1.442695
    %v947 = vpow.pop %v946
    %v948 = vadd.f32 %v947, 1.0
    %v949 = vrcp.pop %v948
    %v950 = vmul.f32 1.0, %v949
    %v951 = vmul.f32 %v943, %v932
    %v952 = vadd.f32 %v673, %v951
    %v953 = vtanh.pop %v952
    %v954 = vsub.f32 1.0, %v950
    %v955 = vmul.f32 %v954, %v953
    %v956 = vmul.f32 %v950, 0.0
    %v957 = vadd.f32 %v955, %v956
    %v958 = vpack.c.bf16 %v957, %v957
    %959 = vmatprep.subr.bf16.mxu0 %v809
    %960 = vmatpush1.bf16.msra.mxu0 %v808
    %961 = vmatprep.subr.bf16.mxu0 %v812
    %962 = vmatpush1.bf16.msra.mxu0 %v811
    %963 = vmatprep.subr.bf16.mxu0 %v815
    %964 = vmatpush1.bf16.msra.mxu0 %v814
    %965 = vmatprep.subr.bf16.mxu0 %v818
    %966 = vmatpush1.bf16.msra.mxu0 %v817
    %967 = vmatprep.subr.bf16.mxu0 %v821
    %968 = vmatpush1.bf16.msra.mxu0 %v820
    %969 = vmatprep.subr.bf16.mxu0 %v824
    %970 = vmatpush1.bf16.msra.mxu0 %v823
    %971 = vmatprep.subr.bf16.mxu0 %v827
    %972 = vmatpush1.bf16.msra.mxu0 %v826
    %973 = vmatprep.subr.bf16.mxu0 %v830
    %974 = vmatpush1.bf16.msra.mxu0 %v829
    %975 = vmatprep.subr.bf16.mxu0 0
    %976 = vmatpush1.bf16.msra.mxu0 0
    %977 = vmatprep.subr.bf16.mxu0 0
    %978 = vmatpush1.bf16.msra.mxu0 0
    %979 = vmatprep.subr.bf16.mxu0 0
    %980 = vmatpush1.bf16.msra.mxu0 0
    %981 = vmatprep.subr.bf16.mxu0 0
    %982 = vmatpush1.bf16.msra.mxu0 0
    %983 = vmatprep.subr.bf16.mxu0 0
    %984 = vmatpush1.bf16.msra.mxu0 0
    %985 = vmatprep.subr.bf16.mxu0 0
    %986 = vmatpush1.bf16.msra.mxu0 0
    %987 = vmatprep.subr.bf16.mxu0 0
    %988 = vmatpush1.bf16.msra.mxu0 0
    %989 = vmatprep.subr.bf16.mxu0 0
    %990 = vmatpush1.bf16.msra.mxu0 0
    %991 = vmatprep.mubr.bf16.mxu0 0
    %992 = vmatmul.mubr.bf16.gmra.mrb[0].mxu0 %v958
    %v993 = vpop.f32.mrb[0].mxu0
    %v994 = vadd.f32 %v719, %v993
    %v995 = vpop.f32.mrb[0].mxu0
    %v996 = vadd.f32 %v723, %v995
    %v997 = vpop.f32.mrb[0].mxu0
    %v998 = vpop.f32.mrb[0].mxu0
    %999 = vdwg.mxu0
    %1000 = vmatprep.subr.bf16.mxu0 0
    %1001 = vmatpush1.bf16.msra.mxu0 %v810
    %1002 = vmatprep.subr.bf16.mxu0 0
    %1003 = vmatpush1.bf16.msra.mxu0 %v813
    %1004 = vmatprep.subr.bf16.mxu0 0
    %1005 = vmatpush1.bf16.msra.mxu0 %v816
    %1006 = vmatprep.subr.bf16.mxu0 0
    %1007 = vmatpush1.bf16.msra.mxu0 %v819
    %1008 = vmatprep.subr.bf16.mxu0 0
    %1009 = vmatpush1.bf16.msra.mxu0 %v822
    %1010 = vmatprep.subr.bf16.mxu0 0
    %1011 = vmatpush1.bf16.msra.mxu0 %v825
    %1012 = vmatprep.subr.bf16.mxu0 0
    %1013 = vmatpush1.bf16.msra.mxu0 %v828
    %1014 = vmatprep.subr.bf16.mxu0 0
    %1015 = vmatpush1.bf16.msra.mxu0 %v831
    %1016 = vmatprep.subr.bf16.mxu0 0
    %1017 = vmatpush1.bf16.msra.mxu0 0
    %1018 = vmatprep.subr.bf16.mxu0 0
    %1019 = vmatpush1.bf16.msra.mxu0 0
    %1020 = vmatprep.subr.bf16.mxu0 0
    %1021 = vmatpush1.bf16.msra.mxu0 0
    %1022 = vmatprep.subr.bf16.mxu0 0
    %1023 = vmatpush1.bf16.msra.mxu0 0
    %1024 = vmatprep.subr.bf16.mxu0 0
    %1025 = vmatpush1.bf16.msra.mxu0 0
    %1026 = vmatprep.subr.bf16.mxu0 0
    %1027 = vmatpush1.bf16.msra.mxu0 0
    %1028 = vmatprep.subr.bf16.mxu0 0
    %1029 = vmatpush1.bf16.msra.mxu0 0
    %1030 = vmatprep.subr.bf16.mxu0 0
    %1031 = vmatpush1.bf16.msra.mxu0 0
    %1032 = vmatprep.mubr.bf16.mxu0 0
    %1033 = vmatmul.mubr.bf16.gmra.mrb[0].mxu0 %v958
    %v1034 = vpop.f32.mrb[0].mxu0
    %v1035 = vadd.f32 %v727, %v1034
    %v1036 = vpop.f32.mrb[0].mxu0
    %v1037 = vpop.f32.mrb[0].mxu0
    %v1038 = vpop.f32.mrb[0].mxu0
    %1039 = vdwg.mxu0
    %v1041 = vrot.slane %v994, 6
    %v1043 = vadd.f32 %v630, %v1041
    %v1044 = vxor.u32 %v1043, 2147483648
    %v1045 = vmul.f32 %v1044, 1.442695
    %v1046 = vpow.pop %v1045
    %v1047 = vadd.f32 %v1046, 1.0
    %v1048 = vrcp.pop %v1047
    %v1049 = vmul.f32 1.0, %v1048
    %v1051 = vrot.slane %v996, 6
    %v1053 = vadd.f32 %v632, %v1051
    %v1054 = vxor.u32 %v1053, 2147483648
    %v1055 = vmul.f32 %v1054, 1.442695
    %v1056 = vpow.pop %v1055
    %v1057 = vadd.f32 %v1056, 1.0
    %v1058 = vrcp.pop %v1057
    %v1059 = vmul.f32 1.0, %v1058
    %v1061 = vrot.slane %v1035, 6
    %v1063 = vmul.f32 %v1049, %v1061
    %v1064 = vadd.f32 %v673, %v1063
    %v1065 = vtanh.pop %v1064
    %v1066 = vsub.f32 1.0, %v1059
    %v1067 = vmul.f32 %v1066, %v1065
    %v1069 = vrot.slane %v957, 6
    %v1071 = vmul.f32 %v1059, %v1069
    %v1072 = vadd.f32 %v1067, %v1071
    %v1073 = vpack.c.bf16 %v1072, %v1072
    %v1075 = vrot.slane %v1073, 1
    %1077 = vmatprep.subr.bf16.mxu0 %v809
    %1078 = vmatpush1.bf16.msra.mxu0 %v808
    %1079 = vmatprep.subr.bf16.mxu0 %v812
    %1080 = vmatpush1.bf16.msra.mxu0 %v811
    %1081 = vmatprep.subr.bf16.mxu0 %v815
    %1082 = vmatpush1.bf16.msra.mxu0 %v814
    %1083 = vmatprep.subr.bf16.mxu0 %v818
    %1084 = vmatpush1.bf16.msra.mxu0 %v817
    %1085 = vmatprep.subr.bf16.mxu0 %v821
    %1086 = vmatpush1.bf16.msra.mxu0 %v820
    %1087 = vmatprep.subr.bf16.mxu0 %v824
    %1088 = vmatpush1.bf16.msra.mxu0 %v823
    %1089 = vmatprep.subr.bf16.mxu0 %v827
    %1090 = vmatpush1.bf16.msra.mxu0 %v826
    %1091 = vmatprep.subr.bf16.mxu0 %v830
    %1092 = vmatpush1.bf16.msra.mxu0 %v829
    %1093 = vmatprep.subr.bf16.mxu0 0
    %1094 = vmatpush1.bf16.msra.mxu0 0
    %1095 = vmatprep.subr.bf16.mxu0 0
    %1096 = vmatpush1.bf16.msra.mxu0 0
    %1097 = vmatprep.subr.bf16.mxu0 0
    %1098 = vmatpush1.bf16.msra.mxu0 0
    %1099 = vmatprep.subr.bf16.mxu0 0
    %1100 = vmatpush1.bf16.msra.mxu0 0
    %1101 = vmatprep.subr.bf16.mxu0 0
    %1102 = vmatpush1.bf16.msra.mxu0 0
    %1103 = vmatprep.subr.bf16.mxu0 0
    %1104 = vmatpush1.bf16.msra.mxu0 0
    %1105 = vmatprep.subr.bf16.mxu0 0
    %1106 = vmatpush1.bf16.msra.mxu0 0
    %1107 = vmatprep.subr.bf16.mxu0 0
    %1108 = vmatpush1.bf16.msra.mxu0 0
    %1109 = vmatprep.mubr.bf16.mxu0 0
    %1110 = vmatmul.mubr.bf16.gmra.mrb[0].mxu0 %v1075
    %v1111 = vpop.f32.mrb[0].mxu0
    %v1112 = vadd.f32 %v719, %v1111
    %v1113 = vpop.f32.mrb[0].mxu0
    %v1114 = vadd.f32 %v723, %v1113
    %v1115 = vpop.f32.mrb[0].mxu0
    %v1116 = vpop.f32.mrb[0].mxu0
    %1117 = vdwg.mxu0
    %1118 = vmatprep.subr.bf16.mxu0 0
    %1119 = vmatpush1.bf16.msra.mxu0 %v810
    %1120 = vmatprep.subr.bf16.mxu0 0
    %1121 = vmatpush1.bf16.msra.mxu0 %v813
    %1122 = vmatprep.subr.bf16.mxu0 0
    %1123 = vmatpush1.bf16.msra.mxu0 %v816
    %1124 = vmatprep.subr.bf16.mxu0 0
    %1125 = vmatpush1.bf16.msra.mxu0 %v819
    %1126 = vmatprep.subr.bf16.mxu0 0
    %1127 = vmatpush1.bf16.msra.mxu0 %v822
    %1128 = vmatprep.subr.bf16.mxu0 0
    %1129 = vmatpush1.bf16.msra.mxu0 %v825
    %1130 = vmatprep.subr.bf16.mxu0 0
    %1131 = vmatpush1.bf16.msra.mxu0 %v828
    %1132 = vmatprep.subr.bf16.mxu0 0
    %1133 = vmatpush1.bf16.msra.mxu0 %v831
    %1134 = vmatprep.subr.bf16.mxu0 0
    %1135 = vmatpush1.bf16.msra.mxu0 0
    %1136 = vmatprep.subr.bf16.mxu0 0
    %1137 = vmatpush1.bf16.msra.mxu0 0
    %1138 = vmatprep.subr.bf16.mxu0 0
    %1139 = vmatpush1.bf16.msra.mxu0 0
    %1140 = vmatprep.subr.bf16.mxu0 0
    %1141 = vmatpush1.bf16.msra.mxu0 0
    %1142 = vmatprep.subr.bf16.mxu0 0
    %1143 = vmatpush1.bf16.msra.mxu0 0
    %1144 = vmatprep.subr.bf16.mxu0 0
    %1145 = vmatpush1.bf16.msra.mxu0 0
    %1146 = vmatprep.subr.bf16.mxu0 0
    %1147 = vmatpush1.bf16.msra.mxu0 0
    %1148 = vmatprep.subr.bf16.mxu0 0
    %1149 = vmatpush1.bf16.msra.mxu0 0
    %1150 = vmatprep.mubr.bf16.mxu0 0
    %1151 = vmatmul.mubr.bf16.gmra.mrb[0].mxu0 %v1075
    %v1152 = vpop.f32.mrb[0].mxu0
    %v1153 = vadd.f32 %v727, %v1152
    %v1154 = vpop.f32.mrb[0].mxu0
    %v1155 = vpop.f32.mrb[0].mxu0
    %v1156 = vpop.f32.mrb[0].mxu0
    %1157 = vdwg.mxu0
    %v1159 = vrot.slane %v1112, 4
    %v1161 = vadd.f32 %v630, %v1159
    %v1162 = vxor.u32 %v1161, 2147483648
    %v1163 = vmul.f32 %v1162, 1.442695
    %v1164 = vpow.pop %v1163
    %v1165 = vadd.f32 %v1164, 1.0
    %v1166 = vrcp.pop %v1165
    %v1167 = vmul.f32 1.0, %v1166
    %v1169 = vrot.slane %v1114, 4
    %v1171 = vadd.f32 %v632, %v1169
    %v1172 = vxor.u32 %v1171, 2147483648
    %v1173 = vmul.f32 %v1172, 1.442695
    %v1174 = vpow.pop %v1173
    %v1175 = vadd.f32 %v1174, 1.0
    %v1176 = vrcp.pop %v1175
    %v1177 = vmul.f32 1.0, %v1176
    %v1179 = vrot.slane %v1153, 4
    %v1181 = vmul.f32 %v1167, %v1179
    %v1182 = vadd.f32 %v673, %v1181
    %v1183 = vtanh.pop %v1182
    %v1184 = vsub.f32 1.0, %v1177
    %v1185 = vmul.f32 %v1184, %v1183
    %v1187 = vrot.slane %v1072, 6
    %v1189 = vmul.f32 %v1177, %v1187
    %v1190 = vadd.f32 %v1185, %v1189
    %v1191 = vpack.c.bf16 %v1190, %v1190
    %v1193 = vrot.slane %v1191, 2
    %1195 = vmatprep.subr.bf16.mxu0 %v809
    %1196 = vmatpush1.bf16.msra.mxu0 %v808
    %1197 = vmatprep.subr.bf16.mxu0 %v812
    %1198 = vmatpush1.bf16.msra.mxu0 %v811
    %1199 = vmatprep.subr.bf16.mxu0 %v815
    %1200 = vmatpush1.bf16.msra.mxu0 %v814
    %1201 = vmatprep.subr.bf16.mxu0 %v818
    %1202 = vmatpush1.bf16.msra.mxu0 %v817
    %1203 = vmatprep.subr.bf16.mxu0 %v821
    %1204 = vmatpush1.bf16.msra.mxu0 %v820
    %1205 = vmatprep.subr.bf16.mxu0 %v824
    %1206 = vmatpush1.bf16.msra.mxu0 %v823
    %1207 = vmatprep.subr.bf16.mxu0 %v827
    %1208 = vmatpush1.bf16.msra.mxu0 %v826
    %1209 = vmatprep.subr.bf16.mxu0 %v830
    %1210 = vmatpush1.bf16.msra.mxu0 %v829
    %1211 = vmatprep.subr.bf16.mxu0 0
    %1212 = vmatpush1.bf16.msra.mxu0 0
    %1213 = vmatprep.subr.bf16.mxu0 0
    %1214 = vmatpush1.bf16.msra.mxu0 0
    %1215 = vmatprep.subr.bf16.mxu0 0
    %1216 = vmatpush1.bf16.msra.mxu0 0
    %1217 = vmatprep.subr.bf16.mxu0 0
    %1218 = vmatpush1.bf16.msra.mxu0 0
    %1219 = vmatprep.subr.bf16.mxu0 0
    %1220 = vmatpush1.bf16.msra.mxu0 0
    %1221 = vmatprep.subr.bf16.mxu0 0
    %1222 = vmatpush1.bf16.msra.mxu0 0
    %1223 = vmatprep.subr.bf16.mxu0 0
    %1224 = vmatpush1.bf16.msra.mxu0 0
    %1225 = vmatprep.subr.bf16.mxu0 0
    %1226 = vmatpush1.bf16.msra.mxu0 0
    %1227 = vmatprep.mubr.bf16.mxu0 0
    %1228 = vmatmul.mubr.bf16.gmra.mrb[0].mxu0 %v1193
    %v1229 = vpop.f32.mrb[0].mxu0
    %v1230 = vadd.f32 %v719, %v1229
    %v1231 = vpop.f32.mrb[0].mxu0
    %v1232 = vadd.f32 %v723, %v1231
    %v1233 = vpop.f32.mrb[0].mxu0
    %v1234 = vpop.f32.mrb[0].mxu0
    %1235 = vdwg.mxu0
    %1236 = vmatprep.subr.bf16.mxu0 0
    %1237 = vmatpush1.bf16.msra.mxu0 %v810
    %1238 = vmatprep.subr.bf16.mxu0 0
    %1239 = vmatpush1.bf16.msra.mxu0 %v813
    %1240 = vmatprep.subr.bf16.mxu0 0
    %1241 = vmatpush1.bf16.msra.mxu0 %v816
    %1242 = vmatprep.subr.bf16.mxu0 0
    %1243 = vmatpush1.bf16.msra.mxu0 %v819
    %1244 = vmatprep.subr.bf16.mxu0 0
    %1245 = vmatpush1.bf16.msra.mxu0 %v822
    %1246 = vmatprep.subr.bf16.mxu0 0
    %1247 = vmatpush1.bf16.msra.mxu0 %v825
    %1248 = vmatprep.subr.bf16.mxu0 0
    %1249 = vmatpush1.bf16.msra.mxu0 %v828
    %1250 = vmatprep.subr.bf16.mxu0 0
    %1251 = vmatpush1.bf16.msra.mxu0 %v831
    %1252 = vmatprep.subr.bf16.mxu0 0
    %1253 = vmatpush1.bf16.msra.mxu0 0
    %1254 = vmatprep.subr.bf16.mxu0 0
    %1255 = vmatpush1.bf16.msra.mxu0 0
    %1256 = vmatprep.subr.bf16.mxu0 0
    %1257 = vmatpush1.bf16.msra.mxu0 0
    %1258 = vmatprep.subr.bf16.mxu0 0
    %1259 = vmatpush1.bf16.msra.mxu0 0
    %1260 = vmatprep.subr.bf16.mxu0 0
    %1261 = vmatpush1.bf16.msra.mxu0 0
    %1262 = vmatprep.subr.bf16.mxu0 0
    %1263 = vmatpush1.bf16.msra.mxu0 0
    %1264 = vmatprep.subr.bf16.mxu0 0
    %1265 = vmatpush1.bf16.msra.mxu0 0
    %1266 = vmatprep.subr.bf16.mxu0 0
    %1267 = vmatpush1.bf16.msra.mxu0 0
    %1268 = vmatprep.mubr.bf16.mxu0 0
    %1269 = vmatmul.mubr.bf16.gmra.mrb[0].mxu0 %v1193
    %v1270 = vpop.f32.mrb[0].mxu0
    %v1271 = vadd.f32 %v727, %v1270
    %v1272 = vpop.f32.mrb[0].mxu0
    %v1273 = vpop.f32.mrb[0].mxu0
    %v1274 = vpop.f32.mrb[0].mxu0
    %1275 = vdwg.mxu0
    %v1277 = vrot.slane %v1230, 2
    %v1279 = vadd.f32 %v630, %v1277
    %v1280 = vxor.u32 %v1279, 2147483648
    %v1281 = vmul.f32 %v1280, 1.442695
    %v1282 = vpow.pop %v1281
    %v1283 = vadd.f32 %v1282, 1.0
    %v1284 = vrcp.pop %v1283
    %v1285 = vmul.f32 1.0, %v1284
    %v1287 = vrot.slane %v1232, 2
    %v1289 = vadd.f32 %v632, %v1287
    %v1290 = vxor.u32 %v1289, 2147483648
    %v1291 = vmul.f32 %v1290, 1.442695
    %v1292 = vpow.pop %v1291
    %v1293 = vadd.f32 %v1292, 1.0
    %v1294 = vrcp.pop %v1293
    %v1295 = vmul.f32 1.0, %v1294
    %v1297 = vrot.slane %v1271, 2
    %v1299 = vmul.f32 %v1285, %v1297
    %v1300 = vadd.f32 %v673, %v1299
    %v1301 = vtanh.pop %v1300
    %v1302 = vsub.f32 1.0, %v1295
    %v1303 = vmul.f32 %v1302, %v1301
    %v1305 = vrot.slane %v1190, 6
    %v1307 = vmul.f32 %v1295, %v1305
    %v1308 = vadd.f32 %v1303, %v1307
    %v1309 = vpack.c.bf16 %v1308, %v1308
    %v1311 = vrot.slane %v1309, 3
    %1313 = vmatprep.subr.bf16.mxu0 %v809
    %1314 = vmatpush1.bf16.msra.mxu0 %v808
    %1315 = vmatprep.subr.bf16.mxu0 %v812
    %1316 = vmatpush1.bf16.msra.mxu0 %v811
    %1317 = vmatprep.subr.bf16.mxu0 %v815
    %1318 = vmatpush1.bf16.msra.mxu0 %v814
    %1319 = vmatprep.subr.bf16.mxu0 %v818
    %1320 = vmatpush1.bf16.msra.mxu0 %v817
    %1321 = vmatprep.subr.bf16.mxu0 %v821
    %1322 = vmatpush1.bf16.msra.mxu0 %v820
    %1323 = vmatprep.subr.bf16.mxu0 %v824
    %1324 = vmatpush1.bf16.msra.mxu0 %v823
    %1325 = vmatprep.subr.bf16.mxu0 %v827
    %1326 = vmatpush1.bf16.msra.mxu0 %v826
    %1327 = vmatprep.subr.bf16.mxu0 %v830
    %1328 = vmatpush1.bf16.msra.mxu0 %v829
    %1329 = vmatprep.subr.bf16.mxu0 0
    %1330 = vmatpush1.bf16.msra.mxu0 0
    %1331 = vmatprep.subr.bf16.mxu0 0
    %1332 = vmatpush1.bf16.msra.mxu0 0
    %1333 = vmatprep.subr.bf16.mxu0 0
    %1334 = vmatpush1.bf16.msra.mxu0 0
    %1335 = vmatprep.subr.bf16.mxu0 0
    %1336 = vmatpush1.bf16.msra.mxu0 0
    %1337 = vmatprep.subr.bf16.mxu0 0
    %1338 = vmatpush1.bf16.msra.mxu0 0
    %1339 = vmatprep.subr.bf16.mxu0 0
    %1340 = vmatpush1.bf16.msra.mxu0 0
    %1341 = vmatprep.subr.bf16.mxu0 0
    %1342 = vmatpush1.bf16.msra.mxu0 0
    %1343 = vmatprep.subr.bf16.mxu0 0
    %1344 = vmatpush1.bf16.msra.mxu0 0
    %1345 = vmatprep.mubr.bf16.mxu0 0
    %1346 = vmatmul.mubr.bf16.gmra.mrb[0].mxu0 %v1311
    %v1347 = vpop.f32.mrb[0].mxu0
    %v1348 = vadd.f32 %v719, %v1347
    %v1349 = vpop.f32.mrb[0].mxu0
    %v1350 = vadd.f32 %v723, %v1349
    %v1351 = vpop.f32.mrb[0].mxu0
    %v1352 = vpop.f32.mrb[0].mxu0
    %1353 = vdwg.mxu0
    %1354 = vmatprep.subr.bf16.mxu0 0
    %1355 = vmatpush1.bf16.msra.mxu0 %v810
    %1356 = vmatprep.subr.bf16.mxu0 0
    %1357 = vmatpush1.bf16.msra.mxu0 %v813
    %1358 = vmatprep.subr.bf16.mxu0 0
    %1359 = vmatpush1.bf16.msra.mxu0 %v816
    %1360 = vmatprep.subr.bf16.mxu0 0
    %1361 = vmatpush1.bf16.msra.mxu0 %v819
    %1362 = vmatprep.subr.bf16.mxu0 0
    %1363 = vmatpush1.bf16.msra.mxu0 %v822
    %1364 = vmatprep.subr.bf16.mxu0 0
    %1365 = vmatpush1.bf16.msra.mxu0 %v825
    %1366 = vmatprep.subr.bf16.mxu0 0
    %1367 = vmatpush1.bf16.msra.mxu0 %v828
    %1368 = vmatprep.subr.bf16.mxu0 0
    %1369 = vmatpush1.bf16.msra.mxu0 %v831
    %1370 = vmatprep.subr.bf16.mxu0 0
    %1371 = vmatpush1.bf16.msra.mxu0 0
    %1372 = vmatprep.subr.bf16.mxu0 0
    %1373 = vmatpush1.bf16.msra.mxu0 0
    %1374 = vmatprep.subr.bf16.mxu0 0
    %1375 = vmatpush1.bf16.msra.mxu0 0
    %1376 = vmatprep.subr.bf16.mxu0 0
    %1377 = vmatpush1.bf16.msra.mxu0 0
    %1378 = vmatprep.subr.bf16.mxu0 0
    %1379 = vmatpush1.bf16.msra.mxu0 0
    %1380 = vmatprep.subr.bf16.mxu0 0
    %1381 = vmatpush1.bf16.msra.mxu0 0
    %1382 = vmatprep.subr.bf16.mxu0 0
    %1383 = vmatpush1.bf16.msra.mxu0 0
    %1384 = vmatprep.subr.bf16.mxu0 0
    %1385 = vmatpush1.bf16.msra.mxu0 0
    %1386 = vmatprep.mubr.bf16.mxu0 0
    %1387 = vmatmul.mubr.bf16.gmra.mrb[0].mxu0 %v1311
    %v1388 = vpop.f32.mrb[0].mxu0
    %v1389 = vadd.f32 %v727, %v1388
    %v1390 = vpop.f32.mrb[0].mxu0
    %v1391 = vpop.f32.mrb[0].mxu0
    %v1392 = vpop.f32.mrb[0].mxu0
    %1393 = vdwg.mxu0
    %v1394 = vadd.f32 %v634, %v1348
    %v1395 = vxor.u32 %v1394, 2147483648
    %v1396 = vmul.f32 %v1395, 1.442695
    %v1397 = vpow.pop %v1396
    %v1398 = vadd.f32 %v1397, 1.0
    %v1399 = vrcp.pop %v1398
    %v1400 = vmul.f32 1.0, %v1399
    %v1401 = vadd.f32 %v636, %v1350
    %v1402 = vxor.u32 %v1401, 2147483648
    %v1403 = vmul.f32 %v1402, 1.442695
    %v1404 = vpow.pop %v1403
    %v1405 = vadd.f32 %v1404, 1.0
    %v1406 = vrcp.pop %v1405
    %v1407 = vmul.f32 1.0, %v1406
    %v1408 = vmul.f32 %v1400, %v1389
    %v1409 = vadd.f32 %v676, %v1408
    %v1410 = vtanh.pop %v1409
    %v1411 = vsub.f32 1.0, %v1407
    %v1412 = vmul.f32 %v1411, %v1410
    %v1414 = vrot.slane %v1308, 6
    %v1416 = vmul.f32 %v1407, %v1414
    %v1417 = vadd.f32 %v1412, %v1416
    %v1418 = vpack.c.bf16 %v1417, %v1417
    %1419 = vmatprep.subr.bf16.mxu0 %v809
    %1420 = vmatpush1.bf16.msra.mxu0 %v808
    %1421 = vmatprep.subr.bf16.mxu0 %v812
    %1422 = vmatpush1.bf16.msra.mxu0 %v811
    %1423 = vmatprep.subr.bf16.mxu0 %v815
    %1424 = vmatpush1.bf16.msra.mxu0 %v814
    %1425 = vmatprep.subr.bf16.mxu0 %v818
    %1426 = vmatpush1.bf16.msra.mxu0 %v817
    %1427 = vmatprep.subr.bf16.mxu0 %v821
    %1428 = vmatpush1.bf16.msra.mxu0 %v820
    %1429 = vmatprep.subr.bf16.mxu0 %v824
    %1430 = vmatpush1.bf16.msra.mxu0 %v823
    %1431 = vmatprep.subr.bf16.mxu0 %v827
    %1432 = vmatpush1.bf16.msra.mxu0 %v826
    %1433 = vmatprep.subr.bf16.mxu0 %v830
    %1434 = vmatpush1.bf16.msra.mxu0 %v829
    %1435 = vmatprep.subr.bf16.mxu0 0
    %1436 = vmatpush1.bf16.msra.mxu0 0
    %1437 = vmatprep.subr.bf16.mxu0 0
    %1438 = vmatpush1.bf16.msra.mxu0 0
    %1439 = vmatprep.subr.bf16.mxu0 0
    %1440 = vmatpush1.bf16.msra.mxu0 0
    %1441 = vmatprep.subr.bf16.mxu0 0
    %1442 = vmatpush1.bf16.msra.mxu0 0
    %1443 = vmatprep.subr.bf16.mxu0 0
    %1444 = vmatpush1.bf16.msra.mxu0 0
    %1445 = vmatprep.subr.bf16.mxu0 0
    %1446 = vmatpush1.bf16.msra.mxu0 0
    %1447 = vmatprep.subr.bf16.mxu0 0
    %1448 = vmatpush1.bf16.msra.mxu0 0
    %1449 = vmatprep.subr.bf16.mxu0 0
    %1450 = vmatpush1.bf16.msra.mxu0 0
    %1451 = vmatprep.mubr.bf16.mxu0 0
    %1452 = vmatmul.mubr.bf16.gmra.mrb[0].mxu0 %v1418
    %v1453 = vpop.f32.mrb[0].mxu0
    %v1454 = vadd.f32 %v719, %v1453
    %v1455 = vpop.f32.mrb[0].mxu0
    %v1456 = vadd.f32 %v723, %v1455
    %v1457 = vpop.f32.mrb[0].mxu0
    %v1458 = vpop.f32.mrb[0].mxu0
    %1459 = vdwg.mxu0
    %1460 = vmatprep.subr.bf16.mxu0 0
    %1461 = vmatpush1.bf16.msra.mxu0 %v810
    %1462 = vmatprep.subr.bf16.mxu0 0
    %1463 = vmatpush1.bf16.msra.mxu0 %v813
    %1464 = vmatprep.subr.bf16.mxu0 0
    %1465 = vmatpush1.bf16.msra.mxu0 %v816
    %1466 = vmatprep.subr.bf16.mxu0 0
    %1467 = vmatpush1.bf16.msra.mxu0 %v819
    %1468 = vmatprep.subr.bf16.mxu0 0
    %1469 = vmatpush1.bf16.msra.mxu0 %v822
    %1470 = vmatprep.subr.bf16.mxu0 0
    %1471 = vmatpush1.bf16.msra.mxu0 %v825
    %1472 = vmatprep.subr.bf16.mxu0 0
    %1473 = vmatpush1.bf16.msra.mxu0 %v828
    %1474 = vmatprep.subr.bf16.mxu0 0
    %1475 = vmatpush1.bf16.msra.mxu0 %v831
    %1476 = vmatprep.subr.bf16.mxu0 0
    %1477 = vmatpush1.bf16.msra.mxu0 0
    %1478 = vmatprep.subr.bf16.mxu0 0
    %1479 = vmatpush1.bf16.msra.mxu0 0
    %1480 = vmatprep.subr.bf16.mxu0 0
    %1481 = vmatpush1.bf16.msra.mxu0 0
    %1482 = vmatprep.subr.bf16.mxu0 0
    %1483 = vmatpush1.bf16.msra.mxu0 0
    %1484 = vmatprep.subr.bf16.mxu0 0
    %1485 = vmatpush1.bf16.msra.mxu0 0
    %1486 = vmatprep.subr.bf16.mxu0 0
    %1487 = vmatpush1.bf16.msra.mxu0 0
    %1488 = vmatprep.subr.bf16.mxu0 0
    %1489 = vmatpush1.bf16.msra.mxu0 0
    %1490 = vmatprep.subr.bf16.mxu0 0
    %1491 = vmatpush1.bf16.msra.mxu0 0
    %1492 = vmatprep.mubr.bf16.mxu0 0
    %1493 = vmatmul.mubr.bf16.gmra.mrb[0].mxu0 %v1418
    %v1494 = vpop.f32.mrb[0].mxu0
    %v1495 = vadd.f32 %v727, %v1494
    %v1496 = vpop.f32.mrb[0].mxu0
    %v1497 = vpop.f32.mrb[0].mxu0
    %v1498 = vpop.f32.mrb[0].mxu0
    %1499 = vdwg.mxu0
    %v1501 = vrot.slane %v1454, 6
    %v1503 = vadd.f32 %v634, %v1501
    %v1504 = vxor.u32 %v1503, 2147483648
    %v1505 = vmul.f32 %v1504, 1.442695
    %v1506 = vpow.pop %v1505
    %v1507 = vadd.f32 %v1506, 1.0
    %v1508 = vrcp.pop %v1507
    %v1509 = vmul.f32 1.0, %v1508
    %v1511 = vrot.slane %v1456, 6
    %v1513 = vadd.f32 %v636, %v1511
    %v1514 = vxor.u32 %v1513, 2147483648
    %v1515 = vmul.f32 %v1514, 1.442695
    %v1516 = vpow.pop %v1515
    %v1517 = vadd.f32 %v1516, 1.0
    %v1518 = vrcp.pop %v1517
    %v1519 = vmul.f32 1.0, %v1518
    %v1521 = vrot.slane %v1495, 6
    %v1523 = vmul.f32 %v1509, %v1521
    %v1524 = vadd.f32 %v676, %v1523
    %v1525 = vtanh.pop %v1524
    %v1526 = vsub.f32 1.0, %v1519
    %v1527 = vmul.f32 %v1526, %v1525
    %v1529 = vrot.slane %v1417, 6
    %v1531 = vmul.f32 %v1519, %v1529
    %v1532 = vadd.f32 %v1527, %v1531
    %v1533 = vpack.c.bf16 %v1532, %v1532
    %v1535 = vrot.slane %v1533, 1
    %1537 = vmatprep.subr.bf16.mxu0 %v809
    %1538 = vmatpush1.bf16.msra.mxu0 %v808
    %1539 = vmatprep.subr.bf16.mxu0 %v812
    %1540 = vmatpush1.bf16.msra.mxu0 %v811
    %1541 = vmatprep.subr.bf16.mxu0 %v815
    %1542 = vmatpush1.bf16.msra.mxu0 %v814
    %1543 = vmatprep.subr.bf16.mxu0 %v818
    %1544 = vmatpush1.bf16.msra.mxu0 %v817
    %1545 = vmatprep.subr.bf16.mxu0 %v821
    %1546 = vmatpush1.bf16.msra.mxu0 %v820
    %1547 = vmatprep.subr.bf16.mxu0 %v824
    %1548 = vmatpush1.bf16.msra.mxu0 %v823
    %1549 = vmatprep.subr.bf16.mxu0 %v827
    %1550 = vmatpush1.bf16.msra.mxu0 %v826
    %1551 = vmatprep.subr.bf16.mxu0 %v830
    %1552 = vmatpush1.bf16.msra.mxu0 %v829
    %1553 = vmatprep.subr.bf16.mxu0 0
    %1554 = vmatpush1.bf16.msra.mxu0 0
    %1555 = vmatprep.subr.bf16.mxu0 0
    %1556 = vmatpush1.bf16.msra.mxu0 0
    %1557 = vmatprep.subr.bf16.mxu0 0
    %1558 = vmatpush1.bf16.msra.mxu0 0
    %1559 = vmatprep.subr.bf16.mxu0 0
    %1560 = vmatpush1.bf16.msra.mxu0 0
    %1561 = vmatprep.subr.bf16.mxu0 0
    %1562 = vmatpush1.bf16.msra.mxu0 0
    %1563 = vmatprep.subr.bf16.mxu0 0
    %1564 = vmatpush1.bf16.msra.mxu0 0
    %1565 = vmatprep.subr.bf16.mxu0 0
    %1566 = vmatpush1.bf16.msra.mxu0 0
    %1567 = vmatprep.subr.bf16.mxu0 0
    %1568 = vmatpush1.bf16.msra.mxu0 0
    %1569 = vmatprep.mubr.bf16.mxu0 0
    %1570 = vmatmul.mubr.bf16.gmra.mrb[0].mxu0 %v1535
    %v1571 = vpop.f32.mrb[0].mxu0
    %v1572 = vadd.f32 %v719, %v1571
    %v1573 = vpop.f32.mrb[0].mxu0
    %v1574 = vadd.f32 %v723, %v1573
    %v1575 = vpop.f32.mrb[0].mxu0
    %v1576 = vpop.f32.mrb[0].mxu0
    %1577 = vdwg.mxu0
    %1578 = vmatprep.subr.bf16.mxu0 0
    %1579 = vmatpush1.bf16.msra.mxu0 %v810
    %1580 = vmatprep.subr.bf16.mxu0 0
    %1581 = vmatpush1.bf16.msra.mxu0 %v813
    %1582 = vmatprep.subr.bf16.mxu0 0
    %1583 = vmatpush1.bf16.msra.mxu0 %v816
    %1584 = vmatprep.subr.bf16.mxu0 0
    %1585 = vmatpush1.bf16.msra.mxu0 %v819
    %1586 = vmatprep.subr.bf16.mxu0 0
    %1587 = vmatpush1.bf16.msra.mxu0 %v822
    %1588 = vmatprep.subr.bf16.mxu0 0
    %1589 = vmatpush1.bf16.msra.mxu0 %v825
    %1590 = vmatprep.subr.bf16.mxu0 0
    %1591 = vmatpush1.bf16.msra.mxu0 %v828
    %1592 = vmatprep.subr.bf16.mxu0 0
    %1593 = vmatpush1.bf16.msra.mxu0 %v831
    %1594 = vmatprep.subr.bf16.mxu0 0
    %1595 = vmatpush1.bf16.msra.mxu0 0
    %1596 = vmatprep.subr.bf16.mxu0 0
    %1597 = vmatpush1.bf16.msra.mxu0 0
    %1598 = vmatprep.subr.bf16.mxu0 0
    %1599 = vmatpush1.bf16.msra.mxu0 0
    %1600 = vmatprep.subr.bf16.mxu0 0
    %1601 = vmatpush1.bf16.msra.mxu0 0
    %1602 = vmatprep.subr.bf16.mxu0 0
    %1603 = vmatpush1.bf16.msra.mxu0 0
    %1604 = vmatprep.subr.bf16.mxu0 0
    %1605 = vmatpush1.bf16.msra.mxu0 0
    %1606 = vmatprep.subr.bf16.mxu0 0
    %1607 = vmatpush1.bf16.msra.mxu0 0
    %1608 = vmatprep.subr.bf16.mxu0 0
    %1609 = vmatpush1.bf16.msra.mxu0 0
    %1610 = vmatprep.mubr.bf16.mxu0 0
    %1611 = vmatmul.mubr.bf16.gmra.mrb[0].mxu0 %v1535
    %v1612 = vpop.f32.mrb[0].mxu0
    %v1613 = vadd.f32 %v727, %v1612
    %v1614 = vpop.f32.mrb[0].mxu0
    %v1615 = vpop.f32.mrb[0].mxu0
    %v1616 = vpop.f32.mrb[0].mxu0
    %1617 = vdwg.mxu0
    %v1619 = vrot.slane %v1572, 4
    %v1621 = vadd.f32 %v634, %v1619
    %v1622 = vxor.u32 %v1621, 2147483648
    %v1623 = vmul.f32 %v1622, 1.442695
    %v1624 = vpow.pop %v1623
    %v1625 = vadd.f32 %v1624, 1.0
    %v1626 = vrcp.pop %v1625
    %v1627 = vmul.f32 1.0, %v1626
    %v1629 = vrot.slane %v1574, 4
    %v1631 = vadd.f32 %v636, %v1629
    %v1632 = vxor.u32 %v1631, 2147483648
    %v1633 = vmul.f32 %v1632, 1.442695
    %v1634 = vpow.pop %v1633
    %v1635 = vadd.f32 %v1634, 1.0
    %v1636 = vrcp.pop %v1635
    %v1637 = vmul.f32 1.0, %v1636
    %v1639 = vrot.slane %v1613, 4
    %v1641 = vmul.f32 %v1627, %v1639
    %v1642 = vadd.f32 %v676, %v1641
    %v1643 = vtanh.pop %v1642
    %v1644 = vsub.f32 1.0, %v1637
    %v1645 = vmul.f32 %v1644, %v1643
    %v1647 = vrot.slane %v1532, 6
    %v1649 = vmul.f32 %v1637, %v1647
    %v1650 = vadd.f32 %v1645, %v1649
    %v1651 = vpack.c.bf16 %v1650, %v1650
    %v1653 = vrot.slane %v1651, 2
    %1655 = vmatprep.subr.bf16.mxu0 %v809
    %1656 = vmatpush1.bf16.msra.mxu0 %v808
    %1657 = vmatprep.subr.bf16.mxu0 %v812
    %1658 = vmatpush1.bf16.msra.mxu0 %v811
    %1659 = vmatprep.subr.bf16.mxu0 %v815
    %1660 = vmatpush1.bf16.msra.mxu0 %v814
    %1661 = vmatprep.subr.bf16.mxu0 %v818
    %1662 = vmatpush1.bf16.msra.mxu0 %v817
    %1663 = vmatprep.subr.bf16.mxu0 %v821
    %1664 = vmatpush1.bf16.msra.mxu0 %v820
    %1665 = vmatprep.subr.bf16.mxu0 %v824
    %1666 = vmatpush1.bf16.msra.mxu0 %v823
    %1667 = vmatprep.subr.bf16.mxu0 %v827
    %1668 = vmatpush1.bf16.msra.mxu0 %v826
    %1669 = vmatprep.subr.bf16.mxu0 %v830
    %1670 = vmatpush1.bf16.msra.mxu0 %v829
    %1671 = vmatprep.subr.bf16.mxu0 0
    %1672 = vmatpush1.bf16.msra.mxu0 0
    %1673 = vmatprep.subr.bf16.mxu0 0
    %1674 = vmatpush1.bf16.msra.mxu0 0
    %1675 = vmatprep.subr.bf16.mxu0 0
    %1676 = vmatpush1.bf16.msra.mxu0 0
    %1677 = vmatprep.subr.bf16.mxu0 0
    %1678 = vmatpush1.bf16.msra.mxu0 0
    %1679 = vmatprep.subr.bf16.mxu0 0
    %1680 = vmatpush1.bf16.msra.mxu0 0
    %1681 = vmatprep.subr.bf16.mxu0 0
    %1682 = vmatpush1.bf16.msra.mxu0 0
    %1683 = vmatprep.subr.bf16.mxu0 0
    %1684 = vmatpush1.bf16.msra.mxu0 0
    %1685 = vmatprep.subr.bf16.mxu0 0
    %1686 = vmatpush1.bf16.msra.mxu0 0
    %1687 = vmatprep.mubr.bf16.mxu0 0
    %1688 = vmatmul.mubr.bf16.gmra.mrb[0].mxu0 %v1653
    %v1689 = vpop.f32.mrb[0].mxu0
    %v1690 = vadd.f32 %v719, %v1689
    %v1691 = vpop.f32.mrb[0].mxu0
    %v1692 = vadd.f32 %v723, %v1691
    %v1693 = vpop.f32.mrb[0].mxu0
    %v1694 = vpop.f32.mrb[0].mxu0
    %1695 = vdwg.mxu0
    %1696 = vmatprep.subr.bf16.mxu0 0
    %1697 = vmatpush1.bf16.msra.mxu0 %v810
    %1698 = vmatprep.subr.bf16.mxu0 0
    %1699 = vmatpush1.bf16.msra.mxu0 %v813
    %1700 = vmatprep.subr.bf16.mxu0 0
    %1701 = vmatpush1.bf16.msra.mxu0 %v816
    %1702 = vmatprep.subr.bf16.mxu0 0
    %1703 = vmatpush1.bf16.msra.mxu0 %v819
    %1704 = vmatprep.subr.bf16.mxu0 0
    %1705 = vmatpush1.bf16.msra.mxu0 %v822
    %1706 = vmatprep.subr.bf16.mxu0 0
    %1707 = vmatpush1.bf16.msra.mxu0 %v825
    %1708 = vmatprep.subr.bf16.mxu0 0
    %1709 = vmatpush1.bf16.msra.mxu0 %v828
    %1710 = vmatprep.subr.bf16.mxu0 0
    %1711 = vmatpush1.bf16.msra.mxu0 %v831
    %1712 = vmatprep.subr.bf16.mxu0 0
    %1713 = vmatpush1.bf16.msra.mxu0 0
    %1714 = vmatprep.subr.bf16.mxu0 0
    %1715 = vmatpush1.bf16.msra.mxu0 0
    %1716 = vmatprep.subr.bf16.mxu0 0
    %1717 = vmatpush1.bf16.msra.mxu0 0
    %1718 = vmatprep.subr.bf16.mxu0 0
    %1719 = vmatpush1.bf16.msra.mxu0 0
    %1720 = vmatprep.subr.bf16.mxu0 0
    %1721 = vmatpush1.bf16.msra.mxu0 0
    %1722 = vmatprep.subr.bf16.mxu0 0
    %1723 = vmatpush1.bf16.msra.mxu0 0
    %1724 = vmatprep.subr.bf16.mxu0 0
    %1725 = vmatpush1.bf16.msra.mxu0 0
    %1726 = vmatprep.subr.bf16.mxu0 0
    %1727 = vmatpush1.bf16.msra.mxu0 0
    %1728 = vmatprep.mubr.bf16.mxu0 0
    %1729 = vmatmul.mubr.bf16.gmra.mrb[0].mxu0 %v1653
    %v1730 = vpop.f32.mrb[0].mxu0
    %v1731 = vadd.f32 %v727, %v1730
    %v1732 = vpop.f32.mrb[0].mxu0
    %v1733 = vpop.f32.mrb[0].mxu0
    %v1734 = vpop.f32.mrb[0].mxu0
    %1735 = vdwg.mxu0
    %v1737 = vrot.slane %v1690, 2
    %v1739 = vadd.f32 %v634, %v1737
    %v1740 = vxor.u32 %v1739, 2147483648
    %v1741 = vmul.f32 %v1740, 1.442695
    %v1742 = vpow.pop %v1741
    %v1743 = vadd.f32 %v1742, 1.0
    %v1744 = vrcp.pop %v1743
    %v1745 = vmul.f32 1.0, %v1744
    %v1747 = vrot.slane %v1692, 2
    %v1749 = vadd.f32 %v636, %v1747
    %v1750 = vxor.u32 %v1749, 2147483648
    %v1751 = vmul.f32 %v1750, 1.442695
    %v1752 = vpow.pop %v1751
    %v1753 = vadd.f32 %v1752, 1.0
    %v1754 = vrcp.pop %v1753
    %v1755 = vmul.f32 1.0, %v1754
    %v1757 = vrot.slane %v1731, 2
    %v1759 = vmul.f32 %v1745, %v1757
    %v1760 = vadd.f32 %v676, %v1759
    %v1761 = vtanh.pop %v1760
    %v1762 = vsub.f32 1.0, %v1755
    %v1763 = vmul.f32 %v1762, %v1761
    %v1765 = vrot.slane %v1650, 6
    %v1767 = vmul.f32 %v1755, %v1765
    %v1768 = vadd.f32 %v1763, %v1767
    %vm1769 = vcmp.gt.f32.partialorder %v1768, 0.0
    %v1770 = vmul.f32 %v1768, 0.01
    %v1771 = vsel %vm1769, %v1768, %v1770
    %v1772 = vpack.c.bf16 %v1771, %v1771
    %v1773 = vld [vmem:[#allocation2 + $0x30] sm:$0x3]
    %v1774 = vpack.c.bf16 %v1773, %v1773
    %v1775 = vld [vmem:[#allocation2 + $0x40] sm:$0x3]
    %v1776 = vpack.c.bf16 %v1775, %v1775
    %v1777 = vld [vmem:[#allocation5 + $0x450] sm:$0xf]
    %v1778 = vld [vmem:[#allocation5 + $0x45c] sm:$0xf]
    %v1779 = vld [vmem:[#allocation5 + $0x468] sm:$0xf]
    %v1780 = vld [vmem:[#allocation5 + $0x474] sm:$0xf]
    %v1781 = vld [vmem:[#allocation5 + $0x480] sm:$0xf]
    %v1782 = vld [vmem:[#allocation5 + $0x48c] sm:$0xf]
    %v1783 = vld [vmem:[#allocation5 + $0x498] sm:$0xf]
    %v1784 = vld [vmem:[#allocation5 + $0x4a4] sm:$0xf]
    %v1785 = vld [vmem:[#allocation5 + $0x4b0] sm:$0xf]
    %v1786 = vld [vmem:[#allocation5 + $0x4bc] sm:$0xf]
    %v1787 = vld [vmem:[#allocation5 + $0x4c8] sm:$0xf]
    %v1788 = vld [vmem:[#allocation5 + $0x4d4] sm:$0xf]
    %v1789 = vld [vmem:[#allocation5 + $0x4e0] sm:$0xf]
    %v1790 = vld [vmem:[#allocation5 + $0x4ec] sm:$0xf]
    %v1791 = vld [vmem:[#allocation5 + $0x4f8] sm:$0xf]
    %v1792 = vld [vmem:[#allocation5 + $0x504] sm:$0xf]
    %v1793 = vld [vmem:[#allocation5 + $0x510] sm:$0xf]
    %v1794 = vld [vmem:[#allocation5 + $0x51c] sm:$0xf]
    %v1795 = vld [vmem:[#allocation5 + $0x528] sm:$0xf]
    %v1796 = vld [vmem:[#allocation5 + $0x534] sm:$0xf]
    %v1797 = vld [vmem:[#allocation5 + $0x540] sm:$0xf]
    %v1798 = vld [vmem:[#allocation5 + $0x54c] sm:$0xf]
    %v1799 = vld [vmem:[#allocation5 + $0x558] sm:$0xf]
    %v1800 = vld [vmem:[#allocation5 + $0x564] sm:$0xf]
    %v1801 = vld [vmem:[#allocation5 + $0x570] sm:$0xf]
    %v1802 = vld [vmem:[#allocation5 + $0x57c] sm:$0xf]
    %v1803 = vld [vmem:[#allocation5 + $0x588] sm:$0xf]
    %v1804 = vld [vmem:[#allocation5 + $0x594] sm:$0xf]
    %v1805 = vld [vmem:[#allocation5 + $0x5a0] sm:$0xf]
    %v1806 = vld [vmem:[#allocation5 + $0x5ac] sm:$0xf]
    %v1807 = vld [vmem:[#allocation5 + $0x5b8] sm:$0xf]
    %v1808 = vld [vmem:[#allocation5 + $0x5c4] sm:$0xf]
    %v1825 = vunpack.c.l.b16 %v1793
    %v1826 = vunpack.c.l.b16 %v1794
    %v1827 = vunpack.c.l.b16 %v1795
    %v1828 = vunpack.c.l.b16 %v1796
    %v1829 = vunpack.c.l.b16 %v1797
    %v1830 = vunpack.c.l.b16 %v1798
    %v1831 = vunpack.c.l.b16 %v1799
    %v1832 = vunpack.c.l.b16 %v1800
    %v1833 = vunpack.c.l.b16 %v1801
    %v1834 = vunpack.c.l.b16 %v1802
    %v1835 = vunpack.c.l.b16 %v1803
    %v1836 = vunpack.c.l.b16 %v1804
    %v1837 = vunpack.c.l.b16 %v1805
    %v1838 = vunpack.c.l.b16 %v1806
    %v1839 = vunpack.c.l.b16 %v1807
    %v1840 = vunpack.c.l.b16 %v1808
    %v1841 = vpack.c.b16 %v1826, %v1825
    %v1842 = vpack.c.b16 %v1828, %v1827
    %v1843 = vpack.c.b16 %v1830, %v1829
    %v1844 = vpack.c.b16 %v1832, %v1831
    %v1845 = vpack.c.b16 %v1834, %v1833
    %v1846 = vpack.c.b16 %v1836, %v1835
    %v1847 = vpack.c.b16 %v1838, %v1837
    %v1848 = vpack.c.b16 %v1840, %v1839
    %1857 = vmatprep.subr.bf16.mxu0 0
    %1858 = vmatpush1.bf16.msra.mxu0 %v1841
    %1859 = vmatprep.subr.bf16.mxu0 0
    %1860 = vmatpush1.bf16.msra.mxu0 %v1842
    %1861 = vmatprep.subr.bf16.mxu0 0
    %1862 = vmatpush1.bf16.msra.mxu0 %v1843
    %1863 = vmatprep.subr.bf16.mxu0 0
    %1864 = vmatpush1.bf16.msra.mxu0 %v1844
    %1865 = vmatprep.subr.bf16.mxu0 0
    %1866 = vmatpush1.bf16.msra.mxu0 %v1845
    %1867 = vmatprep.subr.bf16.mxu0 0
    %1868 = vmatpush1.bf16.msra.mxu0 %v1846
    %1869 = vmatprep.subr.bf16.mxu0 0
    %1870 = vmatpush1.bf16.msra.mxu0 %v1847
    %1871 = vmatprep.subr.bf16.mxu0 0
    %1872 = vmatpush1.bf16.msra.mxu0 %v1848
    %1873 = vmatprep.subr.bf16.mxu0 0
    %1874 = vmatpush1.bf16.msra.mxu0 0
    %1875 = vmatprep.subr.bf16.mxu0 0
    %1876 = vmatpush1.bf16.msra.mxu0 0
    %1877 = vmatprep.subr.bf16.mxu0 0
    %1878 = vmatpush1.bf16.msra.mxu0 0
    %1879 = vmatprep.subr.bf16.mxu0 0
    %1880 = vmatpush1.bf16.msra.mxu0 0
    %1881 = vmatprep.subr.bf16.mxu0 0
    %1882 = vmatpush1.bf16.msra.mxu0 0
    %1883 = vmatprep.subr.bf16.mxu0 0
    %1884 = vmatpush1.bf16.msra.mxu0 0
    %1885 = vmatprep.subr.bf16.mxu0 0
    %1886 = vmatpush1.bf16.msra.mxu0 0
    %1887 = vmatprep.subr.bf16.mxu0 0
    %1888 = vmatpush1.bf16.msra.mxu0 0
    %1889 = vmatprep.mubr.bf16.mxu0 0
    %1890 = vmatmul.mubr.bf16.gmra.mrb[0].mxu0 %v1774
    %v1891 = vpop.f32.mrb[0].mxu0
    %v1892 = vadd.f32 0.0, %v1891
    %v1893 = vpop.f32.mrb[0].mxu0
    %v1894 = vpop.f32.mrb[0].mxu0
    %v1895 = vpop.f32.mrb[0].mxu0
    %1896 = vdwg.mxu0
    %v1898 = vrot.slane %v1772, 3
    %v1916 = vunpack.c.l.b16 %v1777
    %v1917 = vunpack.c.l.b16 %v1778
    %v1918 = vunpack.c.l.b16 %v1779
    %v1919 = vunpack.c.l.b16 %v1780
    %v1920 = vunpack.c.l.b16 %v1781
    %v1921 = vunpack.c.l.b16 %v1782
    %v1922 = vunpack.c.l.b16 %v1783
    %v1923 = vunpack.c.l.b16 %v1784
    %v1924 = vunpack.c.l.b16 %v1785
    %v1925 = vunpack.c.l.b16 %v1786
    %v1926 = vunpack.c.l.b16 %v1787
    %v1927 = vunpack.c.l.b16 %v1788
    %v1928 = vunpack.c.l.b16 %v1789
    %v1929 = vunpack.c.l.b16 %v1790
    %v1930 = vunpack.c.l.b16 %v1791
    %v1931 = vunpack.c.l.b16 %v1792
    %v1932 = vpack.c.b16 %v1917, %v1916
    %v1933 = vpack.c.b16 %v1919, %v1918
    %v1934 = vpack.c.b16 %v1921, %v1920
    %v1935 = vpack.c.b16 %v1923, %v1922
    %v1936 = vpack.c.b16 %v1925, %v1924
    %v1937 = vpack.c.b16 %v1927, %v1926
    %v1938 = vpack.c.b16 %v1929, %v1928
    %v1939 = vpack.c.b16 %v1931, %v1930
    %1948 = vmatprep.subr.bf16.mxu0 0
    %1949 = vmatpush1.bf16.msra.mxu0 %v1932
    %1950 = vmatprep.subr.bf16.mxu0 0
    %1951 = vmatpush1.bf16.msra.mxu0 %v1933
    %1952 = vmatprep.subr.bf16.mxu0 0
    %1953 = vmatpush1.bf16.msra.mxu0 %v1934
    %1954 = vmatprep.subr.bf16.mxu0 0
    %1955 = vmatpush1.bf16.msra.mxu0 %v1935
    %1956 = vmatprep.subr.bf16.mxu0 0
    %1957 = vmatpush1.bf16.msra.mxu0 %v1936
    %1958 = vmatprep.subr.bf16.mxu0 0
    %1959 = vmatpush1.bf16.msra.mxu0 %v1937
    %1960 = vmatprep.subr.bf16.mxu0 0
    %1961 = vmatpush1.bf16.msra.mxu0 %v1938
    %1962 = vmatprep.subr.bf16.mxu0 0
    %1963 = vmatpush1.bf16.msra.mxu0 %v1939
    %1964 = vmatprep.subr.bf16.mxu0 0
    %1965 = vmatpush1.bf16.msra.mxu0 0
    %1966 = vmatprep.subr.bf16.mxu0 0
    %1967 = vmatpush1.bf16.msra.mxu0 0
    %1968 = vmatprep.subr.bf16.mxu0 0
    %1969 = vmatpush1.bf16.msra.mxu0 0
    %1970 = vmatprep.subr.bf16.mxu0 0
    %1971 = vmatpush1.bf16.msra.mxu0 0
    %1972 = vmatprep.subr.bf16.mxu0 0
    %1973 = vmatpush1.bf16.msra.mxu0 0
    %1974 = vmatprep.subr.bf16.mxu0 0
    %1975 = vmatpush1.bf16.msra.mxu0 0
    %1976 = vmatprep.subr.bf16.mxu0 0
    %1977 = vmatpush1.bf16.msra.mxu0 0
    %1978 = vmatprep.subr.bf16.mxu0 0
    %1979 = vmatpush1.bf16.msra.mxu0 0
    %1980 = vmatprep.mubr.bf16.mxu0 0
    %1981 = vmatmul.mubr.bf16.gmra.mrb[0].mxu0 %v1898
    %v1982 = vpop.f32.mrb[0].mxu0
    %v1983 = vadd.f32 %v1892, %v1982
    %v1984 = vpop.f32.mrb[0].mxu0
    %v1985 = vpop.f32.mrb[0].mxu0
    %v1986 = vpop.f32.mrb[0].mxu0
    %1987 = vdwg.mxu0
    %v1988 = vld [vmem:[#allocation5 + $0x5d0] sm:$0x1]
    %v1989 = vunpack.c.l.bf16 %v1988
    %v1990 = vlaneseq
    %v1991 = vshrl.u32 %v1990, 7
    %v1992 = vsub.s32 0, %v1991
    %v1993 = vrot.slane %v1989, %v1992
    %v1994 = vadd.f32 %v1983, %v1993
    %vm1995 = vcmp.gt.f32.partialorder %v1994, 0.0
    %v1996 = vmul.f32 %v1994, 0.01
    %v1997 = vsel %vm1995, %v1994, %v1996
    %v1998 = vpack.c.bf16 %v1997, %v1997
    %v1999 = vld [vmem:[#allocation5 + $0x5e8] sm:$0xf]
    %v2000 = vld [vmem:[#allocation5 + $0x5f4] sm:$0xf]
    %v2001 = vld [vmem:[#allocation5 + $0x600] sm:$0xf]
    %v2002 = vld [vmem:[#allocation5 + $0x60c] sm:$0xf]
    %v2003 = vld [vmem:[#allocation5 + $0x618] sm:$0xf]
    %v2004 = vld [vmem:[#allocation5 + $0x624] sm:$0xf]
    %v2005 = vld [vmem:[#allocation5 + $0x630] sm:$0xf]
    %v2006 = vld [vmem:[#allocation5 + $0x63c] sm:$0xf]
    %v2007 = vld [vmem:[#allocation5 + $0x648] sm:$0xf]
    %v2008 = vld [vmem:[#allocation5 + $0x654] sm:$0xf]
    %v2009 = vld [vmem:[#allocation5 + $0x660] sm:$0xf]
    %v2010 = vld [vmem:[#allocation5 + $0x66c] sm:$0xf]
    %v2011 = vld [vmem:[#allocation5 + $0x678] sm:$0xf]
    %v2012 = vld [vmem:[#allocation5 + $0x684] sm:$0xf]
    %v2013 = vld [vmem:[#allocation5 + $0x690] sm:$0xf]
    %v2014 = vld [vmem:[#allocation5 + $0x69c] sm:$0xf]
    %v2015 = vld [vmem:[#allocation5 + $0x6a8] sm:$0xf]
    %v2016 = vld [vmem:[#allocation5 + $0x6b4] sm:$0xf]
    %v2017 = vld [vmem:[#allocation5 + $0x6c0] sm:$0xf]
    %v2018 = vld [vmem:[#allocation5 + $0x6cc] sm:$0xf]
    %v2019 = vld [vmem:[#allocation5 + $0x6d8] sm:$0xf]
    %v2020 = vld [vmem:[#allocation5 + $0x6e4] sm:$0xf]
    %v2021 = vld [vmem:[#allocation5 + $0x6f0] sm:$0xf]
    %v2022 = vld [vmem:[#allocation5 + $0x6fc] sm:$0xf]
    %v2023 = vld [vmem:[#allocation5 + $0x708] sm:$0xf]
    %v2024 = vld [vmem:[#allocation5 + $0x714] sm:$0xf]
    %v2025 = vld [vmem:[#allocation5 + $0x720] sm:$0xf]
    %v2026 = vld [vmem:[#allocation5 + $0x72c] sm:$0xf]
    %v2027 = vld [vmem:[#allocation5 + $0x738] sm:$0xf]
    %v2028 = vld [vmem:[#allocation5 + $0x744] sm:$0xf]
    %v2029 = vld [vmem:[#allocation5 + $0x750] sm:$0xf]
    %v2030 = vld [vmem:[#allocation5 + $0x75c] sm:$0xf]
    %v2047 = vunpack.c.l.b16 %v2015
    %v2048 = vunpack.c.l.b16 %v2016
    %v2049 = vunpack.c.l.b16 %v2017
    %v2050 = vunpack.c.l.b16 %v2018
    %v2051 = vunpack.c.l.b16 %v2019
    %v2052 = vunpack.c.l.b16 %v2020
    %v2053 = vunpack.c.l.b16 %v2021
    %v2054 = vunpack.c.l.b16 %v2022
    %v2055 = vunpack.c.l.b16 %v2023
    %v2056 = vunpack.c.l.b16 %v2024
    %v2057 = vunpack.c.l.b16 %v2025
    %v2058 = vunpack.c.l.b16 %v2026
    %v2059 = vunpack.c.l.b16 %v2027
    %v2060 = vunpack.c.l.b16 %v2028
    %v2061 = vunpack.c.l.b16 %v2029
    %v2062 = vunpack.c.l.b16 %v2030
    %v2063 = vpack.c.b16 %v2048, %v2047
    %v2064 = vpack.c.b16 %v2050, %v2049
    %v2065 = vpack.c.b16 %v2052, %v2051
    %v2066 = vpack.c.b16 %v2054, %v2053
    %v2067 = vpack.c.b16 %v2056, %v2055
    %v2068 = vpack.c.b16 %v2058, %v2057
    %v2069 = vpack.c.b16 %v2060, %v2059
    %v2070 = vpack.c.b16 %v2062, %v2061
    %2079 = vmatprep.subr.bf16.mxu0 0
    %2080 = vmatpush1.bf16.msra.mxu0 %v2063
    %2081 = vmatprep.subr.bf16.mxu0 0
    %2082 = vmatpush1.bf16.msra.mxu0 %v2064
    %2083 = vmatprep.subr.bf16.mxu0 0
    %2084 = vmatpush1.bf16.msra.mxu0 %v2065
    %2085 = vmatprep.subr.bf16.mxu0 0
    %2086 = vmatpush1.bf16.msra.mxu0 %v2066
    %2087 = vmatprep.subr.bf16.mxu0 0
    %2088 = vmatpush1.bf16.msra.mxu0 %v2067
    %2089 = vmatprep.subr.bf16.mxu0 0
    %2090 = vmatpush1.bf16.msra.mxu0 %v2068
    %2091 = vmatprep.subr.bf16.mxu0 0
    %2092 = vmatpush1.bf16.msra.mxu0 %v2069
    %2093 = vmatprep.subr.bf16.mxu0 0
    %2094 = vmatpush1.bf16.msra.mxu0 %v2070
    %2095 = vmatprep.subr.bf16.mxu0 0
    %2096 = vmatpush1.bf16.msra.mxu0 0
    %2097 = vmatprep.subr.bf16.mxu0 0
    %2098 = vmatpush1.bf16.msra.mxu0 0
    %2099 = vmatprep.subr.bf16.mxu0 0
    %2100 = vmatpush1.bf16.msra.mxu0 0
    %2101 = vmatprep.subr.bf16.mxu0 0
    %2102 = vmatpush1.bf16.msra.mxu0 0
    %2103 = vmatprep.subr.bf16.mxu0 0
    %2104 = vmatpush1.bf16.msra.mxu0 0
    %2105 = vmatprep.subr.bf16.mxu0 0
    %2106 = vmatpush1.bf16.msra.mxu0 0
    %2107 = vmatprep.subr.bf16.mxu0 0
    %2108 = vmatpush1.bf16.msra.mxu0 0
    %2109 = vmatprep.subr.bf16.mxu0 0
    %2110 = vmatpush1.bf16.msra.mxu0 0
    %2111 = vmatprep.mubr.bf16.mxu0 0
    %2112 = vmatmul.mubr.bf16.gmra.mrb[0].mxu0 %v1776
    %v2113 = vpop.f32.mrb[0].mxu0
    %v2114 = vadd.f32 0.0, %v2113
    %v2115 = vpop.f32.mrb[0].mxu0
    %v2116 = vpop.f32.mrb[0].mxu0
    %v2117 = vpop.f32.mrb[0].mxu0
    %2118 = vdwg.mxu0
    %v2135 = vunpack.c.l.b16 %v1999
    %v2136 = vunpack.c.l.b16 %v2000
    %v2137 = vunpack.c.l.b16 %v2001
    %v2138 = vunpack.c.l.b16 %v2002
    %v2139 = vunpack.c.l.b16 %v2003
    %v2140 = vunpack.c.l.b16 %v2004
    %v2141 = vunpack.c.l.b16 %v2005
    %v2142 = vunpack.c.l.b16 %v2006
    %v2143 = vunpack.c.l.b16 %v2007
    %v2144 = vunpack.c.l.b16 %v2008
    %v2145 = vunpack.c.l.b16 %v2009
    %v2146 = vunpack.c.l.b16 %v2010
    %v2147 = vunpack.c.l.b16 %v2011
    %v2148 = vunpack.c.l.b16 %v2012
    %v2149 = vunpack.c.l.b16 %v2013
    %v2150 = vunpack.c.l.b16 %v2014
    %v2151 = vpack.c.b16 %v2136, %v2135
    %v2152 = vpack.c.b16 %v2138, %v2137
    %v2153 = vpack.c.b16 %v2140, %v2139
    %v2154 = vpack.c.b16 %v2142, %v2141
    %v2155 = vpack.c.b16 %v2144, %v2143
    %v2156 = vpack.c.b16 %v2146, %v2145
    %v2157 = vpack.c.b16 %v2148, %v2147
    %v2158 = vpack.c.b16 %v2150, %v2149
    %2167 = vmatprep.subr.bf16.mxu0 0
    %2168 = vmatpush1.bf16.msra.mxu0 %v2151
    %2169 = vmatprep.subr.bf16.mxu0 0
    %2170 = vmatpush1.bf16.msra.mxu0 %v2152
    %2171 = vmatprep.subr.bf16.mxu0 0
    %2172 = vmatpush1.bf16.msra.mxu0 %v2153
    %2173 = vmatprep.subr.bf16.mxu0 0
    %2174 = vmatpush1.bf16.msra.mxu0 %v2154
    %2175 = vmatprep.subr.bf16.mxu0 0
    %2176 = vmatpush1.bf16.msra.mxu0 %v2155
    %2177 = vmatprep.subr.bf16.mxu0 0
    %2178 = vmatpush1.bf16.msra.mxu0 %v2156
    %2179 = vmatprep.subr.bf16.mxu0 0
    %2180 = vmatpush1.bf16.msra.mxu0 %v2157
    %2181 = vmatprep.subr.bf16.mxu0 0
    %2182 = vmatpush1.bf16.msra.mxu0 %v2158
    %2183 = vmatprep.subr.bf16.mxu0 0
    %2184 = vmatpush1.bf16.msra.mxu0 0
    %2185 = vmatprep.subr.bf16.mxu0 0
    %2186 = vmatpush1.bf16.msra.mxu0 0
    %2187 = vmatprep.subr.bf16.mxu0 0
    %2188 = vmatpush1.bf16.msra.mxu0 0
    %2189 = vmatprep.subr.bf16.mxu0 0
    %2190 = vmatpush1.bf16.msra.mxu0 0
    %2191 = vmatprep.subr.bf16.mxu0 0
    %2192 = vmatpush1.bf16.msra.mxu0 0
    %2193 = vmatprep.subr.bf16.mxu0 0
    %2194 = vmatpush1.bf16.msra.mxu0 0
    %2195 = vmatprep.subr.bf16.mxu0 0
    %2196 = vmatpush1.bf16.msra.mxu0 0
    %2197 = vmatprep.subr.bf16.mxu0 0
    %2198 = vmatpush1.bf16.msra.mxu0 0
    %2199 = vmatprep.mubr.bf16.mxu0 0
    %2200 = vmatmul.mubr.bf16.gmra.mrb[0].mxu0 %v1998
    %v2201 = vpop.f32.mrb[0].mxu0
    %v2202 = vadd.f32 %v2114, %v2201
    %v2203 = vpop.f32.mrb[0].mxu0
    %v2204 = vpop.f32.mrb[0].mxu0
    %v2205 = vpop.f32.mrb[0].mxu0
    %2206 = vdwg.mxu0
    %v2207 = vld [vmem:[#allocation5 + $0x768] sm:$0x1]
    %v2208 = vunpack.c.l.bf16 %v2207
    %v2209 = vlaneseq
    %v2210 = vshrl.u32 %v2209, 7
    %v2211 = vsub.s32 0, %v2210
    %v2212 = vrot.slane %v2208, %v2211
    %v2213 = vadd.f32 %v2202, %v2212
    %vm2214 = vcmp.gt.f32.partialorder %v2213, 0.0
    %v2215 = vmul.f32 %v2213, 0.01
    %v2216 = vsel %vm2214, %v2213, %v2215
    %2217 = vst [vmem:[#allocation7] sm:$0x3] %v2216
    // Predicated region
    $region18: #{tpu_custom_call.1} parent=1 // pred_check
      _
    $region19: #{tpu_custom_call.1} parent=1 // pred_check_branch
      %2219 = sbr.rel (0) target = $region21
    $region20: #{tpu_custom_call.1} parent=1 // pred_region
      %s2221 = ssub.s32 32, 32
      %2222 = vsyncadd [#allocation4], %s2221
      %s2224 = sshll.u32 [#allocation7], 4
      %s2225 = int_to_ptr.vmem [resolvable:$true] %s2224
      %2227 = dma.vmem_to_hbm [thread:$0]  %s2225, 32, %s2, [#allocation4]
    $region21: #{tpu_custom_call.1} parent=1 // pred_fallthru
      _
    // Predicated region
    $region22: #{tpu_custom_call.1} parent=1 // pred_check
      _
    $region23: #{tpu_custom_call.1} parent=1 // pred_check_branch
      %2229 = sbr.rel (0) target = $region25
    $region24: #{tpu_custom_call.1} parent=1 // pred_region
      %2230 = dma.done [#allocation4], 32
    $region25: #{tpu_custom_call.1} parent=1 // pred_fallthru
      _
    %2231 = vsyncpa [#allocation3], 1
    %2232 = vsyncpa [#allocation6], 1
    %2233 = vsyncpa [#allocation4], 1

</llo_original>
